<compile_context>
chip_gen: v7x
topology: tpu7x:2x2x1
jax: 0.10.0
libtpu: 0.0.40
codegen_flags: <defaults>
</compile_context>

<pallas_src>
import math
import functools

import jax
import jax.numpy as jnp
from jax.experimental import pallas as pl
from jax.experimental.pallas import tpu as pltpu


def _octave_multipliers(num_octaves, start_octave):
    octs = jnp.arange(start_octave, start_octave + num_octaves, dtype=jnp.float32)
    return (2.0 ** octs) * math.pi


def _fsrt_pos_kernel(pix_ref, kp_ref, pmult_ref, out_ref, *, kp_dim2, pix_octaves):
    # pix_ref   : (1, 2, tN)    x row / y row, lane-dense
    # kp_ref    : (1, 2*KO, 1)  precomputed [kp_sin | kp_cos] (scaled keypoints)
    # pmult_ref : (PO, 1)       pixel octave multipliers (column)
    # out_ref   : (1, C, tN)    C = 2*KO + 4*PO; channel order =
    #                           [kp_sin, kp_cos, sin_x, sin_y, cos_x, cos_y]
    KO2 = kp_dim2                                  # 2 * K * kp_octaves
    PO = pix_octaves
    tN = out_ref.shape[-1]
    odt = out_ref.dtype

    # Per-batch-constant keypoint channels: lane-broadcast and store once.
    kp = kp_ref[0]                                 # (2*KO, 1)
    out_ref[0, 0:KO2, :] = jnp.broadcast_to(kp, (KO2, tN)).astype(odt)

    pix = pix_ref[0]                               # (2, tN)
    pm = pmult_ref[...]                            # (PO, 1)
    b0 = KO2

    # x fully consumed before y is built -> halves peak vreg liveness so spill
    # stores don't compete with the output stores for the store slot.
    # TODO(synk): on v7x a double-angle recurrence across octaves would cut
    # transcendental work ~PO-fold if jnp.sin/cos VALU-expand; kept exact here.
    sx = pm * pix[0:1, :]                          # (PO, tN)
    out_ref[0, b0:b0 + PO, :] = jnp.sin(sx).astype(odt)
    out_ref[0, b0 + 2 * PO:b0 + 3 * PO, :] = jnp.cos(sx).astype(odt)

    sy = pm * pix[1:2, :]                          # (PO, tN)
    out_ref[0, b0 + PO:b0 + 2 * PO, :] = jnp.sin(sy).astype(odt)
    out_ref[0, b0 + 3 * PO:b0 + 4 * PO, :] = jnp.cos(sy).astype(odt)


def _pick_tile(n, cap=2048):
    """Largest multiple of 128 that divides n and is <= cap (requires n % 128 == 0)."""
    best = 128
    m = 256
    while m <= min(n, cap):
        if n % m == 0:
            best = m
        m += 128
    return best


def fsrt_pos_encoder(pixels, kps, *, kp_octaves=4, kp_start_octave=-1,
                     pix_octaves=16, pix_start_octave=-1,
                     out_dtype=jnp.float32):
    """Pallas implementation of FSRTPosEncoder.forward for 4-D pixels + kps."""
    # TODO(synk): the 3-D pixels branch and the kps=None branch of the PyTorch
    # module are not exercised here (same per-point encoding, different glue).
    assert pixels.ndim == 4 and pixels.shape[-1] == 2
    B, H, W, dim = pixels.shape
    N = H * W
    K = kps.shape[-1]
    KO = K * kp_octaves
    PO = pix_octaves
    C = 2 * KO + 2 * dim * PO

    LANE = 128
    if N % LANE == 0:
        # Tiled path: largest multiple-of-128 divisor of N (<= 2048); avoids
        # the tN=128 fallback for awkward resolutions (384, 640, 1152, ...).
        N_pad = N
        tN = _pick_tile(N)
        # v7x: guarantee >=2 grid steps so both TensorCores get work.
        if B * (N // tN) < 2 and tN % 256 == 0:
            tN //= 2
    elif C * N * 4 <= (8 << 20):
        # Non-128-multiple N, small: one full-extent block per batch (block
        # dim == array dim is exempt from the (8,128) rule) -> no padding and
        # no post-kernel slice copy.
        N_pad = N
        tN = N
    else:
        # Rare fallback: large N not a multiple of 128.  Pad to a multiple of
        # 512 (keeps tN >= 512) and slice afterwards.
        # TODO(synk): the post-kernel slice re-copies the output once; a
        # consumer accepting the padded (B, C, N_pad) layout would avoid it.
        N_pad = ((N + 511) // 512) * 512
        tN = _pick_tile(N_pad)

    # Pixels: (B, H, W, 2) -> (B, 2, N_pad); x/y become lane-dense rows.
    pix_t = pixels.reshape(B, N, dim).astype(jnp.float32).transpose(0, 2, 1)
    if N_pad != N:
        pix_t = jnp.pad(pix_t, ((0, 0), (0, 0), (0, N_pad - N)))

    # Keypoint sin/cos hoisted out of the kernel: grid-invariant, tiny op.
    # k-major / octave-minor, matching the PyTorch reshape(B, 1, K*num_octaves).
    kps = kps.astype(jnp.float32)
    kp_mult = _octave_multipliers(kp_octaves, kp_start_octave)
    kp_scaled = kps[:, :, None] * kp_mult[None, None, :]            # (B, K, kp_oct)
    kp_enc = jnp.concatenate(
        [jnp.sin(kp_scaled).reshape(B, KO), jnp.cos(kp_scaled).reshape(B, KO)],
        axis=-1).reshape(B, 2 * KO, 1)

    pix_mult = _octave_multipliers(pix_octaves, pix_start_octave).reshape(PO, 1)

    out_bytes = jnp.dtype(out_dtype).itemsize
    cost = pl.CostEstimate(
        flops=2 * dim * PO * B * N_pad,
        transcendentals=2 * dim * PO * B * N_pad,
        bytes_accessed=(B * C * N_pad * out_bytes          # dominant: writeback
                        + B * dim * N_pad * 4 + B * 2 * KO * 4 + PO * 4))

    kernel = functools.partial(_fsrt_pos_kernel, kp_dim2=2 * KO, pix_octaves=PO)
    out = pl.pallas_call(
        kernel,
        out_shape=jax.ShapeDtypeStruct((B, C, N_pad), out_dtype),
        grid=(B, N_pad // tN),
        in_specs=[
            pl.BlockSpec((1, dim, tN), lambda b, t: (b, 0, t)),     # pixels (x/y rows)
            pl.BlockSpec((1, 2 * KO, 1), lambda b, t: (b, 0, 0)),   # kp sin/cos
            pl.BlockSpec((PO, 1), lambda b, t: (0, 0)),             # pixel multipliers
        ],
        out_specs=pl.BlockSpec((1, C, tN), lambda b, t: (b, 0, t)),
        compiler_params=pltpu.CompilerParams(
            dimension_semantics=("parallel", "parallel")),
        cost_estimate=cost,
    )(pix_t, kp_enc, pix_mult)

    if N_pad != N:
        out = out[:, :, :N]
    # (B, C, N) -> (B, C, H, W): free reshape.
    return out.reshape(B, C, H, W)


# ---------------- pure-JAX reference (mirrors the PyTorch code) ----------------
def _positional_encoding_ref(coords, num_octaves, start_octave):
    B, P, dim = coords.shape
    mult = _octave_multipliers(num_octaves, start_octave)
    scaled = coords[..., None] * mult
    sines = jnp.sin(scaled).reshape(B, P, dim * num_octaves)
    cosines = jnp.cos(scaled).reshape(B, P, dim * num_octaves)
    return jnp.concatenate([sines, cosines], axis=-1)


def _fsrt_ref(pixels, kps, *, kp_octaves=4, kp_start_octave=-1,
              pix_octaves=16, pix_start_octave=-1):
    B, H, W, _ = pixels.shape
    pix_flat = pixels.reshape(B, H * W, 2)
    pix_enc = _positional_encoding_ref(pix_flat, pix_octaves, pix_start_octave)
    pix_enc = pix_enc.reshape(B, H, W, -1).transpose(0, 3, 1, 2)
    kp_enc = _positional_encoding_ref(kps[:, None, :], kp_octaves, kp_start_octave)
    kp_enc = kp_enc.reshape(B, -1, 1, 1)
    kp_enc = jnp.broadcast_to(kp_enc, (B, kp_enc.shape[1], H, W))
    return jnp.concatenate([kp_enc, pix_enc], axis=1)


if __name__ == "__main__":
    key = jax.random.PRNGKey(0)
    kp_key, pix_key = jax.random.split(key)

    # Case 1: H*W multiple of 128 (tiled path), f32 output.
    B, H, W, K = 2, 16, 16, 10
    pixels = jax.random.uniform(pix_key, (B, H, W, 2), jnp.float32,
                                minval=-1.0, maxval=1.0)
    kps = jax.random.uniform(kp_key, (B, K), jnp.float32, minval=-1.0, maxval=1.0)

    out = jax.block_until_ready(fsrt_pos_encoder(pixels, kps))
    ref = _fsrt_ref(pixels, kps)
    assert out.shape == (B, 2 * K * 4 + 4 * 16, H, W), out.shape
    assert jnp.allclose(out, ref, atol=1e-5, rtol=1e-5), "f32 mismatch (tiled path)"

    # Case 2: bf16 output path (halves HBM writeback; offsets stay 16-aligned).
    out_bf16 = jax.block_until_ready(
        fsrt_pos_encoder(pixels, kps, out_dtype=jnp.bfloat16))
    assert out_bf16.dtype == jnp.bfloat16
    assert jnp.allclose(out_bf16.astype(jnp.float32), ref, atol=3e-2), "bf16 mismatch"

    # Case 3: H*W not a multiple of 128 -> single full-extent block per batch.
    H2, W2 = 20, 20
    pixels2 = jax.random.uniform(jax.random.PRNGKey(1), (B, H2, W2, 2),
                                 jnp.float32, minval=-1.0, maxval=1.0)
    out2 = jax.block_until_ready(fsrt_pos_encoder(pixels2, kps))
    ref2 = _fsrt_ref(pixels2, kps)
    assert out2.shape == ref2.shape, (out2.shape, ref2.shape)
    assert jnp.allclose(out2, ref2, atol=1e-5, rtol=1e-5), "f32 mismatch (full-block path)"

    print("KERNEL_OK")
</pallas_src>

<mosaic_0001>
module attributes {stable_mosaic.version = 11 : i64} {
  func.func @_fsrt_pos_kernel(%arg0: i32, %arg1: i32, %arg2: memref<1x2x256xf32, #tpu.memory_space<vmem>>, %arg3: memref<1x80x1xf32, #tpu.memory_space<vmem>>, %arg4: memref<16x1xf32, #tpu.memory_space<vmem>>, %arg5: memref<1x144x256xf32, #tpu.memory_space<vmem>>) attributes {dimension_semantics = [#tpu.dimension_semantics<parallel>, #tpu.dimension_semantics<parallel>], iteration_bounds = array<i64: 2, 1>, scalar_prefetch = 0 : i64, scratch_operands = 0 : i64, tpu.core_type = #tpu.core_type<tc>, window_params = [{transform_indices = @transform_0, window_bounds = array<i64: 1, 2, 256>}, {transform_indices = @transform_1, window_bounds = array<i64: 1, 80, 1>}, {pipeline_mode = #tpu.pipeline_mode<synchronous>, transform_indices = @transform_2, window_bounds = array<i64: 16, 1>}, {transform_indices = @transform_3, window_bounds = array<i64: 1, 144, 256>}]} {
    %c0 = arith.constant 0 : index
    %c0_0 = arith.constant 0 : index
    %c0_1 = arith.constant 0 : index
    %0 = vector.load %arg3[%c0, %c0_0, %c0_1] : memref<1x80x1xf32, #tpu.memory_space<vmem>>, vector<1x80x1xf32>
    %1 = vector.shape_cast %0 : vector<1x80x1xf32> to vector<80x1xf32>
    %2 = vector.shape_cast %1 : vector<80x1xf32> to vector<80x1xf32>
    %3 = vector.broadcast %2 : vector<80x1xf32> to vector<80x256xf32>
    %c0_2 = arith.constant 0 : index
    %c0_3 = arith.constant 0 : index
    %c0_4 = arith.constant 0 : index
    %4 = vector.load %arg5[%c0_2, %c0_3, %c0_4] : memref<1x144x256xf32, #tpu.memory_space<vmem>>, vector<1x80x256xf32>
    %5 = vector.shape_cast %4 : vector<1x80x256xf32> to vector<80x256xf32>
    %6 = vector.shape_cast %3 : vector<80x256xf32> to vector<1x80x256xf32>
    tpu.vector_store %arg5[%c0_2, %c0_3, %c0_4], %6 {strides = array<i32>} : memref<1x144x256xf32, #tpu.memory_space<vmem>>, vector<1x80x256xf32>,
    %c0_5 = arith.constant 0 : index
    %c0_6 = arith.constant 0 : index
    %c0_7 = arith.constant 0 : index
    %7 = vector.load %arg2[%c0_5, %c0_6, %c0_7] : memref<1x2x256xf32, #tpu.memory_space<vmem>>, vector<1x2x256xf32>
    %8 = vector.shape_cast %7 : vector<1x2x256xf32> to vector<2x256xf32>
    %c0_8 = arith.constant 0 : index
    %c0_9 = arith.constant 0 : index
    %9 = vector.load %arg4[%c0_8, %c0_9] : memref<16x1xf32, #tpu.memory_space<vmem>>, vector<16x1xf32>
    %10 = vector.extract_strided_slice %8 {offsets = [0, 0], sizes = [1, 256], strides = [1, 1]} : vector<2x256xf32> to vector<1x256xf32>
    %11 = vector.broadcast %9 : vector<16x1xf32> to vector<16x256xf32>
    %12 = vector.broadcast %10 : vector<1x256xf32> to vector<16x256xf32>
    %13 = arith.mulf %11, %12 : vector<16x256xf32>
    %14 = math.sin %13 : vector<16x256xf32>
    %c0_10 = arith.constant 0 : index
    %c80 = arith.constant 80 : index
    %c0_11 = arith.constant 0 : index
    %15 = vector.load %arg5[%c0_10, %c80, %c0_11] : memref<1x144x256xf32, #tpu.memory_space<vmem>>, vector<1x16x256xf32>
    %16 = vector.shape_cast %15 : vector<1x16x256xf32> to vector<16x256xf32>
    %17 = vector.shape_cast %14 : vector<16x256xf32> to vector<1x16x256xf32>
    tpu.vector_store %arg5[%c0_10, %c80, %c0_11], %17 {strides = array<i32>} : memref<1x144x256xf32, #tpu.memory_space<vmem>>, vector<1x16x256xf32>,
    %18 = math.cos %13 : vector<16x256xf32>
    %c0_12 = arith.constant 0 : index
    %c112 = arith.constant 112 : index
    %c0_13 = arith.constant 0 : index
    %19 = vector.load %arg5[%c0_12, %c112, %c0_13] : memref<1x144x256xf32, #tpu.memory_space<vmem>>, vector<1x16x256xf32>
    %20 = vector.shape_cast %19 : vector<1x16x256xf32> to vector<16x256xf32>
    %21 = vector.shape_cast %18 : vector<16x256xf32> to vector<1x16x256xf32>
    tpu.vector_store %arg5[%c0_12, %c112, %c0_13], %21 {strides = array<i32>} : memref<1x144x256xf32, #tpu.memory_space<vmem>>, vector<1x16x256xf32>,
    %22 = vector.extract_strided_slice %8 {offsets = [1, 0], sizes = [1, 256], strides = [1, 1]} : vector<2x256xf32> to vector<1x256xf32>
    %23 = vector.broadcast %9 : vector<16x1xf32> to vector<16x256xf32>
    %24 = vector.broadcast %22 : vector<1x256xf32> to vector<16x256xf32>
    %25 = arith.mulf %23, %24 : vector<16x256xf32>
    %26 = math.sin %25 : vector<16x256xf32>
    %c0_14 = arith.constant 0 : index
    %c96 = arith.constant 96 : index
    %c0_15 = arith.constant 0 : index
    %27 = vector.load %arg5[%c0_14, %c96, %c0_15] : memref<1x144x256xf32, #tpu.memory_space<vmem>>, vector<1x16x256xf32>
    %28 = vector.shape_cast %27 : vector<1x16x256xf32> to vector<16x256xf32>
    %29 = vector.shape_cast %26 : vector<16x256xf32> to vector<1x16x256xf32>
    tpu.vector_store %arg5[%c0_14, %c96, %c0_15], %29 {strides = array<i32>} : memref<1x144x256xf32, #tpu.memory_space<vmem>>, vector<1x16x256xf32>,
    %30 = math.cos %25 : vector<16x256xf32>
    %c0_16 = arith.constant 0 : index
    %c128 = arith.constant 128 : index
    %c0_17 = arith.constant 0 : index
    %31 = vector.load %arg5[%c0_16, %c128, %c0_17] : memref<1x144x256xf32, #tpu.memory_space<vmem>>, vector<1x16x256xf32>
    %32 = vector.shape_cast %31 : vector<1x16x256xf32> to vector<16x256xf32>
    %33 = vector.shape_cast %30 : vector<16x256xf32> to vector<1x16x256xf32>
    tpu.vector_store %arg5[%c0_16, %c128, %c0_17], %33 {strides = array<i32>} : memref<1x144x256xf32, #tpu.memory_space<vmem>>, vector<1x16x256xf32>,
    return
  }
  func.func @transform_0(%arg0: i32, %arg1: i32) -> (i32, i32, i32) {
    %c0_i32 = arith.constant 0 : i32
    %c0_i32_0 = arith.constant 0 : i32
    return %arg0, %c0_i32, %arg1 : i32, i32, i32
  }
  func.func @transform_1(%arg0: i32, %arg1: i32) -> (i32, i32, i32) {
    %c0_i32 = arith.constant 0 : i32
    %c0_i32_0 = arith.constant 0 : i32
    %c0_i32_1 = arith.constant 0 : i32
    return %arg0, %c0_i32, %c0_i32_0 : i32, i32, i32
  }
  func.func @transform_2(%arg0: i32, %arg1: i32) -> (i32, i32) {
    %c0_i32 = arith.constant 0 : i32
    %c0_i32_0 = arith.constant 0 : i32
    %c0_i32_1 = arith.constant 0 : i32
    return %c0_i32, %c0_i32_0 : i32, i32
  }
  func.func @transform_3(%arg0: i32, %arg1: i32) -> (i32, i32, i32) {
    %c0_i32 = arith.constant 0 : i32
    %c0_i32_0 = arith.constant 0 : i32
    return %arg0, %c0_i32, %arg1 : i32, i32, i32
  }
}

</mosaic_0001>

<llo_original>
// kernel: tpu_custom_call.1
$region0: #{tpu_custom_call.1}
  #allocation0 [shape = 'u32[]', space=smem, size = 0x4, offset = 0x4, fixed_abs, tag = 'smem constant byte address 0x4 - core index']
  #allocation1 [shape = 'u32[144,128]{1,0:T(1,128)}', space=vmem, size = 0x12000, scoped, tag = 'internal scratch']
  %s0 = inlined_call_operand.vmem [shape: f32[2,2,256], index: 0, kind: input, shape index: {}]
  %s1 = inlined_call_operand.vmem [shape: f32[2,80,1], index: 1, kind: input, shape index: {}]
  %s2 = inlined_call_operand.vmem [shape: f32[16,1], index: 2, kind: input, shape index: {}]
  %s3 = inlined_call_operand.hbm [shape: f32[2,144,256], index: 3, kind: output, shape index: {}]
  %s4 = sld [smem:[#allocation0]]
  $region45: #{tpu_custom_call.1} parent=0
    _
  %s6 = ssub.s32 1, %s4
  %s7 = scalar_select 0, %s6, %s4
  $region1: #{tpu_custom_call.1} parent=0
    #allocation2 [shape = 'u8[294912]{0}', space=vmem, size = 0x48000, scoped, tag = 'output window, operand 0']
    #allocation3 [shape = 's32[2]{0}', space=sflag, size = 0x8, scoped, tag = 'scoped memory for tpu_custom_call.1']
    %8 = vsyncpa [#allocation3], 0
    %s9 = scalar_lea.sflag [#allocation3], 1
    %10 = vsyncpa %s9, 0
    loop: start=0, step=1, limit=4
    $region2: #{tpu_custom_call.1} parent=1 // loop_pre_header
      _
    $region3: #{tpu_custom_call.1} parent=1 // loop_header
      %s12 = sphi 0, %s16
      %p13 = scmp.ge.s32.totalorder %s12, 4
      %s19 = sphi 0, %s31
      %s20 = sphi 0, %s27
      %s21 = sphi 0, %s19
      %s22 = sphi 0, %s20
      %s23 = sphi 0, %s21
      %s24 = sphi 0, %s22
      %s36 = sphi 0, %s38
      %s39 = sphi 0, %s36
      %s40 = sphi 0, %s39
      %s56 = sphi 0, %s40
      %s62 = sphi 0, %s64
      %s65 = sphi 0, %s62
      %s66 = sphi 0, %s65
      %s82 = sphi 0, %s66
      %s86 = sphi 0, %s86
      %s88 = sphi 0, %s86
      %s89 = sphi 0, %s88
      %s103 = sphi 0, %s89
      %s111 = sphi 0, %s113
      %s114 = sphi 0, %s111
      %s115 = sphi 0, %s114
      %s131 = sphi 0, %s115
    $region4: #{tpu_custom_call.1} parent=1 // loop_header_branch
      %15 = sbr.rel (%p13) target = $region8
    $region5: #{tpu_custom_call.1} parent=1 // loop_body
      %s17 = ssub.s32 %s12, 1
      %s18 = ssub.s32 %s12, 2
      %s25 = sadd.s32 1, %s20
      %p26 = scmp.ge.s32.totalorder %s25, 1
      %s27 = scalar_select %p26, 0, %s25
      %s28 = sadd.s32 1, %s19
      %s29 = scalar_select %p26, %s28, %s19
      %p30 = scmp.ge.s32.totalorder %s29, 2
      %s31 = scalar_select %p30, 0, %s29
      %s32 = ssub.s32 %s19, %s31
      %s33 = ssub.s32 %s20, %s27
      %s34 = sor.u32 %s32, %s33
      %p35 = scmp.eq.s32.totalorder %s34, 0
      %s37 = sadd.s32 %s36, 1
      %s38 = scalar_select %p35, %s36, %s37
      %p41 = pneg %p35
      %p42 = scmp.eq.s32.totalorder %s12, 1
      %p43 = por %p41, %p42
      %p44 = scmp.ne.s32.totalorder %s36, %s39
      %p45 = scmp.eq.s32.totalorder %s12, 0
      %p46 = por %p44, %p45
      %p47 = scmp.ne.s32.totalorder %s36, %s39
      %p48 = scmp.eq.s32.totalorder %s17, 1
      %p49 = por %p47, %p48
      %p50 = scmp.ne.s32.totalorder %s39, %s40
      %p51 = scmp.eq.s32.totalorder %s17, 0
      %p52 = por %p50, %p51
      %p53 = scmp.ne.s32.totalorder %s39, %s40
      %p54 = scmp.eq.s32.totalorder %s18, 1
      %p55 = por %p53, %p54
      %p57 = scmp.ne.s32.totalorder %s40, %s56
      %p58 = scmp.eq.s32.totalorder %s18, 0
      %p59 = por %p57, %p58
      %s60 = ssub.s32 %s19, %s31
      %p61 = scmp.eq.s32.totalorder %s60, 0
      %s63 = sadd.s32 %s62, 1
      %s64 = scalar_select %p61, %s62, %s63
      %p67 = pneg %p61
      %p68 = scmp.eq.s32.totalorder %s12, 1
      %p69 = por %p67, %p68
      %p70 = scmp.ne.s32.totalorder %s62, %s65
      %p71 = scmp.eq.s32.totalorder %s12, 0
      %p72 = por %p70, %p71
      %p73 = scmp.ne.s32.totalorder %s62, %s65
      %p74 = scmp.eq.s32.totalorder %s17, 1
      %p75 = por %p73, %p74
      %p76 = scmp.ne.s32.totalorder %s65, %s66
      %p77 = scmp.eq.s32.totalorder %s17, 0
      %p78 = por %p76, %p77
      %p79 = scmp.ne.s32.totalorder %s65, %s66
      %p80 = scmp.eq.s32.totalorder %s18, 1
      %p81 = por %p79, %p80
      %p83 = scmp.ne.s32.totalorder %s66, %s82
      %p84 = scmp.eq.s32.totalorder %s18, 0
      %p85 = por %p83, %p84
      %s87 = sadd.s32 %s86, 1
      %p90 = scmp.eq.s32.totalorder %s12, 1
      %p91 = scmp.ne.s32.totalorder %s86, %s88
      %p92 = scmp.eq.s32.totalorder %s12, 0
      %p93 = por %p91, %p92
      %p94 = scmp.ne.s32.totalorder %s86, %s88
      %p95 = scmp.eq.s32.totalorder %s17, 1
      %p96 = por %p94, %p95
      %p97 = scmp.ne.s32.totalorder %s88, %s89
      %p98 = scmp.eq.s32.totalorder %s17, 0
      %p99 = por %p97, %p98
      %p100 = scmp.ne.s32.totalorder %s88, %s89
      %p101 = scmp.eq.s32.totalorder %s18, 1
      %p102 = por %p100, %p101
      %p104 = scmp.ne.s32.totalorder %s89, %s103
      %p105 = scmp.eq.s32.totalorder %s18, 0
      %p106 = por %p104, %p105
      %s107 = ssub.s32 %s19, %s31
      %s108 = ssub.s32 %s20, %s27
      %s109 = sor.u32 %s107, %s108
      %p110 = scmp.eq.s32.totalorder %s109, 0
      %s112 = sadd.s32 %s111, 1
      %s113 = scalar_select %p110, %s111, %s112
      %p116 = pneg %p110
      %p117 = scmp.eq.s32.totalorder %s12, 1
      %p118 = por %p116, %p117
      %p119 = scmp.ne.s32.totalorder %s111, %s114
      %p120 = scmp.eq.s32.totalorder %s12, 0
      %p121 = por %p119, %p120
      %p122 = scmp.ne.s32.totalorder %s111, %s114
      %p123 = scmp.eq.s32.totalorder %s17, 1
      %p124 = por %p122, %p123
      %p125 = scmp.ne.s32.totalorder %s114, %s115
      %p126 = scmp.eq.s32.totalorder %s17, 0
      %p127 = por %p125, %p126
      %p128 = scmp.ne.s32.totalorder %s114, %s115
      %p129 = scmp.eq.s32.totalorder %s18, 1
      %p130 = por %p128, %p129
      %p132 = scmp.ne.s32.totalorder %s115, %s131
      %p133 = scmp.eq.s32.totalorder %s18, 0
      %p134 = por %p132, %p133
      %p135 = scmp.le.s32.totalorder 1, %s12
      %p136 = scmp.lt.s32.totalorder %s12, 3
      %p137 = pnand %p135, %p136
      %p138 = pneg %p137
      // Predicated region
      $region9: #{tpu_custom_call.1} parent=5 // pred_check
        _
      $region10: #{tpu_custom_call.1} parent=5 // pred_check_branch
        %140 = sbr.rel (%p137) target = $region12
      $region11: #{tpu_custom_call.1} parent=5 // pred_region
        %s141 = ssub.s32 %s12, 1
        // Predicated region
        $region13: #{tpu_custom_call.1} parent=11 // pred_check
          %p142 = pneg %p99
        $region14: #{tpu_custom_call.1} parent=11 // pred_check_branch
          %144 = sbr.rel (%p142) target = $region16
        $region15: #{tpu_custom_call.1} parent=11 // pred_region
          _
        $region16: #{tpu_custom_call.1} parent=11 // pred_fallthru
          _
      $region12: #{tpu_custom_call.1} parent=5 // pred_fallthru
        _
      %p145 = scmp.lt.s32.totalorder %s12, 2
      // Predicated region
      $region17: #{tpu_custom_call.1} parent=5 // pred_check
        %p146 = pneg %p145
      $region18: #{tpu_custom_call.1} parent=5 // pred_check_branch
        %148 = sbr.rel (%p146) target = $region20
      $region19: #{tpu_custom_call.1} parent=5 // pred_region
        // Predicated region
        $region21: #{tpu_custom_call.1} parent=19 // pred_check
          %p149 = pneg %p46
        $region22: #{tpu_custom_call.1} parent=19 // pred_check_branch
          %151 = sbr.rel (%p149) target = $region24
        $region23: #{tpu_custom_call.1} parent=19 // pred_region
          %s152 = smul.u32 2, %s20
          %p153 = scmp.lt.s32.totalorder %s19, 1
          %s154 = scalar_select %p153, %s19, 1
          %p155 = scmp.lt.s32.totalorder %s152, 1
          %s156 = scalar_select %p155, %s152, 1
          %s157 = smul.addr %s154, 2
          %s158 = sadd.s32 %s156, %s157
          %s159 = smul.addr %s158, 2
          %s160 = scalar_lea.vmem %s0, %s159
          %s161 = smul.u32 2, %s20
        $region24: #{tpu_custom_call.1} parent=19 // pred_fallthru
          _
        // Predicated region
        $region25: #{tpu_custom_call.1} parent=19 // pred_check
          %p162 = pneg %p72
        $region26: #{tpu_custom_call.1} parent=19 // pred_check_branch
          %164 = sbr.rel (%p162) target = $region28
        $region27: #{tpu_custom_call.1} parent=19 // pred_region
          %p165 = scmp.lt.s32.totalorder %s19, 1
          %s166 = scalar_select %p165, %s19, 1
          %s167 = smul.addr %s166, 10
          %s168 = smul.addr %s167, 8
          %s169 = scalar_lea.vmem %s1, %s168
        $region28: #{tpu_custom_call.1} parent=19 // pred_fallthru
          _
      $region20: #{tpu_custom_call.1} parent=5 // pred_fallthru
        _
      %p170 = scmp.le.s32.totalorder 1, %s12
      %p171 = scmp.lt.s32.totalorder %s12, 3
      %p172 = pnand %p170, %p171
      %p173 = pneg %p172
      // Predicated region
      $region29: #{tpu_custom_call.1} parent=5 // pred_check
        _
      $region30: #{tpu_custom_call.1} parent=5 // pred_check_branch
        %175 = sbr.rel (%p172) target = $region32
      $region31: #{tpu_custom_call.1} parent=5 // pred_region
        %s176 = ssub.s32 %s12, 1
        %s177 = smul.u32 2, %s22
        %p178 = scmp.lt.s32.totalorder %s21, 1
        %s179 = scalar_select %p178, %s21, 1
        %p180 = scmp.lt.s32.totalorder %s177, 1
        %s181 = scalar_select %p180, %s177, 1
        %s182 = smul.addr %s179, 2
        %s183 = sadd.s32 %s181, %s182
        %s184 = smul.addr %s183, 2
        %s185 = scalar_lea.vmem %s0, %s184
        %p186 = pneg %p52
        %p187 = pneg %p49
        %p188 = scmp.lt.s32.totalorder %s21, 1
        %s189 = scalar_select %p188, %s21, 1
        %s190 = smul.addr %s189, 10
        %s191 = smul.addr %s190, 8
        %s192 = scalar_lea.vmem %s1, %s191
        %p193 = pneg %p78
        %p194 = pneg %p75
        %p195 = pneg %p99
        %p196 = pneg %p96
        %p197 = pneg %p127
        %p198 = pneg %p124
        %s199 = sand.u32 %s114, 1
        %s200 = scalar_lea.sflag [#allocation3], %s199
        %s201 = sand.u32 %s114, 1
        %s202 = smul.addr %s201, 288
        %s203 = scalar_lea.vmem [#allocation2], %s202
        %s204 = smul.u32 2, %s22
        %p205 = scmp.lt.s32.totalorder %s21, 1
        %s206 = scalar_select %p205, %s21, 1
        %p207 = scmp.lt.s32.totalorder %s204, 1
        %s208 = scalar_select %p207, %s204, 1
        %s209 = smul.addr %s206, 2
        %s210 = sadd.s32 %s208, %s209
        %s211 = smul.addr %s210, 2
        %s212 = scalar_lea.vmem %s0, %s211
        %s213 = smul.u32 2, %s22
        %p214 = scmp.lt.s32.totalorder %s21, 1
        %s215 = scalar_select %p214, %s21, 1
        %s216 = smul.addr %s215, 10
        %s217 = smul.addr %s216, 8
        %s218 = scalar_lea.vmem %s1, %s217
        %s219 = smul.u32 2, %s22
        %v220 = vld [vmem:[%s218] sm:$0xff]
        %v221 = vld [vmem:[%s218 + $0x8] sm:$0xff]
        %v222 = vld [vmem:[%s218 + $0x10] sm:$0xff]
        %v223 = vld [vmem:[%s218 + $0x18] sm:$0xff]
        %v224 = vld [vmem:[%s218 + $0x20] sm:$0xff]
        %v225 = vld [vmem:[%s218 + $0x28] sm:$0xff]
        %v226 = vld [vmem:[%s218 + $0x30] sm:$0xff]
        %v227 = vld [vmem:[%s218 + $0x38] sm:$0xff]
        %v228 = vld [vmem:[%s218 + $0x40] sm:$0xff]
        %v229 = vld [vmem:[%s218 + $0x48] sm:$0xff]
        %231 = vset.pattern.permute.xlu0 0
        %232 = vperm.xlu0 %231, %v220
        %v233 = vpop.permute.xlu0 %232
        %236 = vset.pattern.permute.xlu0 0
        %237 = vperm.xlu0 %236, %v221
        %v238 = vpop.permute.xlu0 %237
        %241 = vset.pattern.permute.xlu0 0
        %242 = vperm.xlu0 %241, %v222
        %v243 = vpop.permute.xlu0 %242
        %246 = vset.pattern.permute.xlu0 0
        %247 = vperm.xlu0 %246, %v223
        %v248 = vpop.permute.xlu0 %247
        %251 = vset.pattern.permute.xlu0 0
        %252 = vperm.xlu0 %251, %v224
        %v253 = vpop.permute.xlu0 %252
        %256 = vset.pattern.permute.xlu0 0
        %257 = vperm.xlu0 %256, %v225
        %v258 = vpop.permute.xlu0 %257
        %261 = vset.pattern.permute.xlu0 0
        %262 = vperm.xlu0 %261, %v226
        %v263 = vpop.permute.xlu0 %262
        %266 = vset.pattern.permute.xlu0 0
        %267 = vperm.xlu0 %266, %v227
        %v268 = vpop.permute.xlu0 %267
        %271 = vset.pattern.permute.xlu0 0
        %272 = vperm.xlu0 %271, %v228
        %v273 = vpop.permute.xlu0 %272
        %276 = vset.pattern.permute.xlu0 0
        %277 = vperm.xlu0 %276, %v229
        %v278 = vpop.permute.xlu0 %277
        %280 = vst [vmem:[%s203] sm:$0xff] %v233
        %281 = vst [vmem:[%s203 + $0x8] sm:$0xff] %v233
        %282 = vst [vmem:[%s203 + $0x10] sm:$0xff] %v238
        %283 = vst [vmem:[%s203 + $0x18] sm:$0xff] %v238
        %284 = vst [vmem:[%s203 + $0x20] sm:$0xff] %v243
        %285 = vst [vmem:[%s203 + $0x28] sm:$0xff] %v243
        %286 = vst [vmem:[%s203 + $0x30] sm:$0xff] %v248
        %287 = vst [vmem:[%s203 + $0x38] sm:$0xff] %v248
        %288 = vst [vmem:[%s203 + $0x40] sm:$0xff] %v253
        %289 = vst [vmem:[%s203 + $0x48] sm:$0xff] %v253
        %290 = vst [vmem:[%s203 + $0x50] sm:$0xff] %v258
        %291 = vst [vmem:[%s203 + $0x58] sm:$0xff] %v258
        %292 = vst [vmem:[%s203 + $0x60] sm:$0xff] %v263
        %293 = vst [vmem:[%s203 + $0x68] sm:$0xff] %v263
        %294 = vst [vmem:[%s203 + $0x70] sm:$0xff] %v268
        %295 = vst [vmem:[%s203 + $0x78] sm:$0xff] %v268
        %296 = vst [vmem:[%s203 + $0x80] sm:$0xff] %v273
        %297 = vst [vmem:[%s203 + $0x88] sm:$0xff] %v273
        %298 = vst [vmem:[%s203 + $0x90] sm:$0xff] %v278
        %299 = vst [vmem:[%s203 + $0x98] sm:$0xff] %v278
        %v300 = vld [vmem:[%s212] sm:$0xf]
        %v301 = vld [vmem:[%s2] sm:$0xff]
        %v302 = vld [vmem:[%s2 + $0x8] sm:$0xff]
        %304 = vset.pattern.permute.xlu0 0
        %305 = vperm.xlu0 %304, %v301
        %v306 = vpop.permute.xlu0 %305
        %309 = vset.pattern.permute.xlu0 0
        %310 = vperm.xlu0 %309, %v302
        %v311 = vpop.permute.xlu0 %310
        %v314 = vlaneseq
        %v315 = vshrl.u32 %v314, 7
        %v316 = vsub.s32 0, %v315
        %v317 = vrot.slane %v300, %v316
        %v318 = vlaneseq
        %v319 = vshrl.u32 %v318, 7
        %v320 = vsub.s32 2, %v319
        %v321 = vrot.slane %v300, %v320
        %v324 = vlaneseq
        %v325 = vshrl.u32 %v324, 7
        %v326 = vsub.s32 0, %v325
        %v327 = vrot.slane %v317, %v326
        %v328 = vlaneseq
        %v329 = vshrl.u32 %v328, 7
        %v330 = vsub.s32 0, %v329
        %v331 = vrot.slane %v321, %v330
        %v332 = vmul.f32 %v306, %v327
        %v333 = vmul.f32 %v306, %v331
        %v334 = vmul.f32 %v311, %v327
        %v335 = vmul.f32 %v311, %v331
        %v336 = vand.u32 2147483647, %v332
        %vm337 = vcmp.le.f32.partialorder %v336, 0.7853982
        %vm338 = vcmp.lt.s32.totalorder %v332, 0
        %v339 = vand.u32 %v332, 2139095040
        %v340 = vshrl.u32 %v339, 23
        %v341 = vsub.s32 %v340, 127
        %v342 = vand.u32 2147483647, %v332
        %v343 = vand.u32 %v342, 8388607
        %v344 = vor.u32 %v343, 8388608
        %v345 = vsub.s32 0, %v344
        %v346 = vadd.s32 %v341, 1
        %vm347 = vcmp.gt.s32.totalorder %v346, 0
        %v348 = vsel %vm347, %v346, 0
        %v349 = vshrl.u32 %v348, 5
        %v350 = vand.u32 %v348, 31
        %v351 = vsub.s32 32, %v350
        %v352 = vshrl.u32 683565275, %v351
        %v353 = vshll.u32 683565275, %v350
        %v354 = vshrl.u32 2475754826, %v351
        %v355 = vor.u32 %v353, %v354
        %v356 = vshll.u32 2475754826, %v350
        %v357 = vshrl.u32 2131351028, %v351
        %v358 = vor.u32 %v356, %v357
        %v359 = vshll.u32 2131351028, %v350
        %v360 = vshrl.u32 2102212464, %v351
        %v361 = vor.u32 %v359, %v360
        %v362 = vshll.u32 2102212464, %v350
        %v363 = vshrl.u32 920167782, %v351
        %v364 = vor.u32 %v362, %v363
        %v365 = vshll.u32 920167782, %v350
        %v366 = vshrl.u32 1326507024, %v351
        %v367 = vor.u32 %v365, %v366
        %vm368 = vcmp.lt.s32.totalorder %v349, 1
        %vm369 = vcmp.lt.s32.totalorder %v349, 2
        %vm370 = vcmp.lt.s32.totalorder %v349, 3
        %vm371 = vcmp.lt.s32.totalorder %v349, 4
        %v372 = vsel %vm368, %v352, %v355
        %v373 = vsel %vm371, %v361, 2102212464
        %v374 = vsel %vm370, %v358, %v373
        %v375 = vsel %vm369, %v372, %v374
        %v376 = vsel %vm368, %v355, %v358
        %v377 = vsel %vm371, %v364, 920167782
        %v378 = vsel %vm370, %v361, %v377
        %v379 = vsel %vm369, %v376, %v378
        %v380 = vsel %vm368, %v358, %v361
        %v381 = vsel %vm371, %v367, 1326507024
        %v382 = vsel %vm370, %v364, %v381
        %v383 = vsel %vm369, %v380, %v382
        %v384 = vshll.u32 %v344, 8
        %v385 = vmul.u32.u64.compose %v384, %v383
        %v386 = vextract.low.u32 %v385
        %v387 = vextract.high.u32 %v385
        %v388 = vmul.u32.u64.compose %v384, %v379
        %v389 = vextract.low.u32 %v388
        %v390 = vextract.high.u32 %v388
        %v391 = vmul.u32 %v384, %v375
        %v392 = vadd.s32 %v387, %v389
        %vm393 = vc.u32 %v387, %v389
        %v394 = vadd.s32 %v390, 1
        %v395 = vsel %vm393, %v394, %v390
        %v396 = vadd.s32 %v391, %v395
        %v397 = vadd.s32 %v396, 536870912
        %v398 = vshrl.u32 %v397, 30
        %v399 = vshll.u32 %v398, 30
        %v400 = vsub.s32 %v396, %v399
        %vm401 = vcmp.lt.s32.totalorder %v400, 0
        %v402 = vsub.s32 0, %v400
        %v403 = vsel %vm401, %v402, %v400
        %v404 = vclz %v403
        %v405 = vsub.s32 %v404, 2
        %vm406 = vcmp.gt.s32.totalorder 0, %v405
        %v407 = vsel %vm406, 0, %v405
        %v408 = vsub.s32 32, %v407
        %v409 = vshll.u32 %v400, %v407
        %v410 = vshrl.u32 %v392, %v408
        %v411 = vor.u32 %v409, %v410
        %v412 = vsub.s32 4294967266, %v407
        %v413 = vadd.s32 %v412, 127
        %v414 = vshll.u32 %v413, 23
        %v415 = vor.u32 4788187, %v414
        %v416 = vand.u32 2147483647, %v415
        %v418 = vcvt.s32.f32 %v411
        %v419 = vmul.f32 %v418, %v416
        %v420 = vxor.u32 %v419, 2147483648
        %v421 = vsel %vm338, %v420, %v419
        %v422 = vsub.s32 4, %v398
        %v423 = vsel %vm338, %v422, %v398
        %v424 = vsel %vm337, %v332, %v421
        %v425 = vsel %vm337, 0, %v423
        %v426 = vcosq.f32.pop %v424
        %v427 = vsinq.f32.pop %v424
        %vm428 = vweird.f32 %v332
        %v429 = vadd.s32 %v425, 3
        %v430 = vand.u32 %v429, 3
        %vm431 = vcmp.lt.s32.totalorder %v430, 2
        %vm432 = vcmp.eq.s32.totalorder %v430, 0
        %v433 = vxor.u32 %v427, 2147483648
        %v434 = vsel %vm432, %v426, %v433
        %vm435 = vcmp.eq.s32.totalorder %v430, 2
        %v436 = vxor.u32 %v426, 2147483648
        %v437 = vsel %vm435, %v436, %v427
        %v438 = vsel %vm431, %v434, %v437
        %v439 = vsel %vm428, nan, %v438
        %v440 = vand.u32 2147483647, %v333
        %vm441 = vcmp.le.f32.partialorder %v440, 0.7853982
        %vm442 = vcmp.lt.s32.totalorder %v333, 0
        %v443 = vand.u32 %v333, 2139095040
        %v444 = vshrl.u32 %v443, 23
        %v445 = vsub.s32 %v444, 127
        %v446 = vand.u32 2147483647, %v333
        %v447 = vand.u32 %v446, 8388607
        %v448 = vor.u32 %v447, 8388608
        %v449 = vsub.s32 0, %v448
        %v450 = vadd.s32 %v445, 1
        %vm451 = vcmp.gt.s32.totalorder %v450, 0
        %v452 = vsel %vm451, %v450, 0
        %v453 = vshrl.u32 %v452, 5
        %v454 = vand.u32 %v452, 31
        %v455 = vsub.s32 32, %v454
        %v456 = vshrl.u32 683565275, %v455
        %v457 = vshll.u32 683565275, %v454
        %v458 = vshrl.u32 2475754826, %v455
        %v459 = vor.u32 %v457, %v458
        %v460 = vshll.u32 2475754826, %v454
        %v461 = vshrl.u32 2131351028, %v455
        %v462 = vor.u32 %v460, %v461
        %v463 = vshll.u32 2131351028, %v454
        %v464 = vshrl.u32 2102212464, %v455
        %v465 = vor.u32 %v463, %v464
        %v466 = vshll.u32 2102212464, %v454
        %v467 = vshrl.u32 920167782, %v455
        %v468 = vor.u32 %v466, %v467
        %v469 = vshll.u32 920167782, %v454
        %v470 = vshrl.u32 1326507024, %v455
        %v471 = vor.u32 %v469, %v470
        %vm472 = vcmp.lt.s32.totalorder %v453, 1
        %vm473 = vcmp.lt.s32.totalorder %v453, 2
        %vm474 = vcmp.lt.s32.totalorder %v453, 3
        %vm475 = vcmp.lt.s32.totalorder %v453, 4
        %v476 = vsel %vm472, %v456, %v459
        %v477 = vsel %vm475, %v465, 2102212464
        %v478 = vsel %vm474, %v462, %v477
        %v479 = vsel %vm473, %v476, %v478
        %v480 = vsel %vm472, %v459, %v462
        %v481 = vsel %vm475, %v468, 920167782
        %v482 = vsel %vm474, %v465, %v481
        %v483 = vsel %vm473, %v480, %v482
        %v484 = vsel %vm472, %v462, %v465
        %v485 = vsel %vm475, %v471, 1326507024
        %v486 = vsel %vm474, %v468, %v485
        %v487 = vsel %vm473, %v484, %v486
        %v488 = vshll.u32 %v448, 8
        %v489 = vmul.u32.u64.compose %v488, %v487
        %v490 = vextract.low.u32 %v489
        %v491 = vextract.high.u32 %v489
        %v492 = vmul.u32.u64.compose %v488, %v483
        %v493 = vextract.low.u32 %v492
        %v494 = vextract.high.u32 %v492
        %v495 = vmul.u32 %v488, %v479
        %v496 = vadd.s32 %v491, %v493
        %vm497 = vc.u32 %v491, %v493
        %v498 = vadd.s32 %v494, 1
        %v499 = vsel %vm497, %v498, %v494
        %v500 = vadd.s32 %v495, %v499
        %v501 = vadd.s32 %v500, 536870912
        %v502 = vshrl.u32 %v501, 30
        %v503 = vshll.u32 %v502, 30
        %v504 = vsub.s32 %v500, %v503
        %vm505 = vcmp.lt.s32.totalorder %v504, 0
        %v506 = vsub.s32 0, %v504
        %v507 = vsel %vm505, %v506, %v504
        %v508 = vclz %v507
        %v509 = vsub.s32 %v508, 2
        %vm510 = vcmp.gt.s32.totalorder 0, %v509
        %v511 = vsel %vm510, 0, %v509
        %v512 = vsub.s32 32, %v511
        %v513 = vshll.u32 %v504, %v511
        %v514 = vshrl.u32 %v496, %v512
        %v515 = vor.u32 %v513, %v514
        %v516 = vsub.s32 4294967266, %v511
        %v517 = vadd.s32 %v516, 127
        %v518 = vshll.u32 %v517, 23
        %v519 = vor.u32 4788187, %v518
        %v520 = vand.u32 2147483647, %v519
        %v522 = vcvt.s32.f32 %v515
        %v523 = vmul.f32 %v522, %v520
        %v524 = vxor.u32 %v523, 2147483648
        %v525 = vsel %vm442, %v524, %v523
        %v526 = vsub.s32 4, %v502
        %v527 = vsel %vm442, %v526, %v502
        %v528 = vsel %vm441, %v333, %v525
        %v529 = vsel %vm441, 0, %v527
        %v530 = vcosq.f32.pop %v528
        %v531 = vsinq.f32.pop %v528
        %vm532 = vweird.f32 %v333
        %v533 = vadd.s32 %v529, 3
        %v534 = vand.u32 %v533, 3
        %vm535 = vcmp.lt.s32.totalorder %v534, 2
        %vm536 = vcmp.eq.s32.totalorder %v534, 0
        %v537 = vxor.u32 %v531, 2147483648
        %v538 = vsel %vm536, %v530, %v537
        %vm539 = vcmp.eq.s32.totalorder %v534, 2
        %v540 = vxor.u32 %v530, 2147483648
        %v541 = vsel %vm539, %v540, %v531
        %v542 = vsel %vm535, %v538, %v541
        %v543 = vsel %vm532, nan, %v542
        %v544 = vand.u32 2147483647, %v334
        %vm545 = vcmp.le.f32.partialorder %v544, 0.7853982
        %vm546 = vcmp.lt.s32.totalorder %v334, 0
        %v547 = vand.u32 %v334, 2139095040
        %v548 = vshrl.u32 %v547, 23
        %v549 = vsub.s32 %v548, 127
        %v550 = vand.u32 2147483647, %v334
        %v551 = vand.u32 %v550, 8388607
        %v552 = vor.u32 %v551, 8388608
        %v553 = vsub.s32 0, %v552
        %v554 = vadd.s32 %v549, 1
        %vm555 = vcmp.gt.s32.totalorder %v554, 0
        %v556 = vsel %vm555, %v554, 0
        %v557 = vshrl.u32 %v556, 5
        %v558 = vand.u32 %v556, 31
        %v559 = vsub.s32 32, %v558
        %v560 = vshrl.u32 683565275, %v559
        %v561 = vshll.u32 683565275, %v558
        %v562 = vshrl.u32 2475754826, %v559
        %v563 = vor.u32 %v561, %v562
        %v564 = vshll.u32 2475754826, %v558
        %v565 = vshrl.u32 2131351028, %v559
        %v566 = vor.u32 %v564, %v565
        %v567 = vshll.u32 2131351028, %v558
        %v568 = vshrl.u32 2102212464, %v559
        %v569 = vor.u32 %v567, %v568
        %v570 = vshll.u32 2102212464, %v558
        %v571 = vshrl.u32 920167782, %v559
        %v572 = vor.u32 %v570, %v571
        %v573 = vshll.u32 920167782, %v558
        %v574 = vshrl.u32 1326507024, %v559
        %v575 = vor.u32 %v573, %v574
        %vm576 = vcmp.lt.s32.totalorder %v557, 1
        %vm577 = vcmp.lt.s32.totalorder %v557, 2
        %vm578 = vcmp.lt.s32.totalorder %v557, 3
        %vm579 = vcmp.lt.s32.totalorder %v557, 4
        %v580 = vsel %vm576, %v560, %v563
        %v581 = vsel %vm579, %v569, 2102212464
        %v582 = vsel %vm578, %v566, %v581
        %v583 = vsel %vm577, %v580, %v582
        %v584 = vsel %vm576, %v563, %v566
        %v585 = vsel %vm579, %v572, 920167782
        %v586 = vsel %vm578, %v569, %v585
        %v587 = vsel %vm577, %v584, %v586
        %v588 = vsel %vm576, %v566, %v569
        %v589 = vsel %vm579, %v575, 1326507024
        %v590 = vsel %vm578, %v572, %v589
        %v591 = vsel %vm577, %v588, %v590
        %v592 = vshll.u32 %v552, 8
        %v593 = vmul.u32.u64.compose %v592, %v591
        %v594 = vextract.low.u32 %v593
        %v595 = vextract.high.u32 %v593
        %v596 = vmul.u32.u64.compose %v592, %v587
        %v597 = vextract.low.u32 %v596
        %v598 = vextract.high.u32 %v596
        %v599 = vmul.u32 %v592, %v583
        %v600 = vadd.s32 %v595, %v597
        %vm601 = vc.u32 %v595, %v597
        %v602 = vadd.s32 %v598, 1
        %v603 = vsel %vm601, %v602, %v598
        %v604 = vadd.s32 %v599, %v603
        %v605 = vadd.s32 %v604, 536870912
        %v606 = vshrl.u32 %v605, 30
        %v607 = vshll.u32 %v606, 30
        %v608 = vsub.s32 %v604, %v607
        %vm609 = vcmp.lt.s32.totalorder %v608, 0
        %v610 = vsub.s32 0, %v608
        %v611 = vsel %vm609, %v610, %v608
        %v612 = vclz %v611
        %v613 = vsub.s32 %v612, 2
        %vm614 = vcmp.gt.s32.totalorder 0, %v613
        %v615 = vsel %vm614, 0, %v613
        %v616 = vsub.s32 32, %v615
        %v617 = vshll.u32 %v608, %v615
        %v618 = vshrl.u32 %v600, %v616
        %v619 = vor.u32 %v617, %v618
        %v620 = vsub.s32 4294967266, %v615
        %v621 = vadd.s32 %v620, 127
        %v622 = vshll.u32 %v621, 23
        %v623 = vor.u32 4788187, %v622
        %v624 = vand.u32 2147483647, %v623
        %v626 = vcvt.s32.f32 %v619
        %v627 = vmul.f32 %v626, %v624
        %v628 = vxor.u32 %v627, 2147483648
        %v629 = vsel %vm546, %v628, %v627
        %v630 = vsub.s32 4, %v606
        %v631 = vsel %vm546, %v630, %v606
        %v632 = vsel %vm545, %v334, %v629
        %v633 = vsel %vm545, 0, %v631
        %v634 = vcosq.f32.pop %v632
        %v635 = vsinq.f32.pop %v632
        %vm636 = vweird.f32 %v334
        %v637 = vadd.s32 %v633, 3
        %v638 = vand.u32 %v637, 3
        %vm639 = vcmp.lt.s32.totalorder %v638, 2
        %vm640 = vcmp.eq.s32.totalorder %v638, 0
        %v641 = vxor.u32 %v635, 2147483648
        %v642 = vsel %vm640, %v634, %v641
        %vm643 = vcmp.eq.s32.totalorder %v638, 2
        %v644 = vxor.u32 %v634, 2147483648
        %v645 = vsel %vm643, %v644, %v635
        %v646 = vsel %vm639, %v642, %v645
        %v647 = vsel %vm636, nan, %v646
        %v648 = vand.u32 2147483647, %v335
        %vm649 = vcmp.le.f32.partialorder %v648, 0.7853982
        %vm650 = vcmp.lt.s32.totalorder %v335, 0
        %v651 = vand.u32 %v335, 2139095040
        %v652 = vshrl.u32 %v651, 23
        %v653 = vsub.s32 %v652, 127
        %v654 = vand.u32 2147483647, %v335
        %v655 = vand.u32 %v654, 8388607
        %v656 = vor.u32 %v655, 8388608
        %v657 = vsub.s32 0, %v656
        %v658 = vadd.s32 %v653, 1
        %vm659 = vcmp.gt.s32.totalorder %v658, 0
        %v660 = vsel %vm659, %v658, 0
        %v661 = vshrl.u32 %v660, 5
        %v662 = vand.u32 %v660, 31
        %v663 = vsub.s32 32, %v662
        %v664 = vshrl.u32 683565275, %v663
        %v665 = vshll.u32 683565275, %v662
        %v666 = vshrl.u32 2475754826, %v663
        %v667 = vor.u32 %v665, %v666
        %v668 = vshll.u32 2475754826, %v662
        %v669 = vshrl.u32 2131351028, %v663
        %v670 = vor.u32 %v668, %v669
        %v671 = vshll.u32 2131351028, %v662
        %v672 = vshrl.u32 2102212464, %v663
        %v673 = vor.u32 %v671, %v672
        %v674 = vshll.u32 2102212464, %v662
        %v675 = vshrl.u32 920167782, %v663
        %v676 = vor.u32 %v674, %v675
        %v677 = vshll.u32 920167782, %v662
        %v678 = vshrl.u32 1326507024, %v663
        %v679 = vor.u32 %v677, %v678
        %vm680 = vcmp.lt.s32.totalorder %v661, 1
        %vm681 = vcmp.lt.s32.totalorder %v661, 2
        %vm682 = vcmp.lt.s32.totalorder %v661, 3
        %vm683 = vcmp.lt.s32.totalorder %v661, 4
        %v684 = vsel %vm680, %v664, %v667
        %v685 = vsel %vm683, %v673, 2102212464
        %v686 = vsel %vm682, %v670, %v685
        %v687 = vsel %vm681, %v684, %v686
        %v688 = vsel %vm680, %v667, %v670
        %v689 = vsel %vm683, %v676, 920167782
        %v690 = vsel %vm682, %v673, %v689
        %v691 = vsel %vm681, %v688, %v690
        %v692 = vsel %vm680, %v670, %v673
        %v693 = vsel %vm683, %v679, 1326507024
        %v694 = vsel %vm682, %v676, %v693
        %v695 = vsel %vm681, %v692, %v694
        %v696 = vshll.u32 %v656, 8
        %v697 = vmul.u32.u64.compose %v696, %v695
        %v698 = vextract.low.u32 %v697
        %v699 = vextract.high.u32 %v697
        %v700 = vmul.u32.u64.compose %v696, %v691
        %v701 = vextract.low.u32 %v700
        %v702 = vextract.high.u32 %v700
        %v703 = vmul.u32 %v696, %v687
        %v704 = vadd.s32 %v699, %v701
        %vm705 = vc.u32 %v699, %v701
        %v706 = vadd.s32 %v702, 1
        %v707 = vsel %vm705, %v706, %v702
        %v708 = vadd.s32 %v703, %v707
        %v709 = vadd.s32 %v708, 536870912
        %v710 = vshrl.u32 %v709, 30
        %v711 = vshll.u32 %v710, 30
        %v712 = vsub.s32 %v708, %v711
        %vm713 = vcmp.lt.s32.totalorder %v712, 0
        %v714 = vsub.s32 0, %v712
        %v715 = vsel %vm713, %v714, %v712
        %v716 = vclz %v715
        %v717 = vsub.s32 %v716, 2
        %vm718 = vcmp.gt.s32.totalorder 0, %v717
        %v719 = vsel %vm718, 0, %v717
        %v720 = vsub.s32 32, %v719
        %v721 = vshll.u32 %v712, %v719
        %v722 = vshrl.u32 %v704, %v720
        %v723 = vor.u32 %v721, %v722
        %v724 = vsub.s32 4294967266, %v719
        %v725 = vadd.s32 %v724, 127
        %v726 = vshll.u32 %v725, 23
        %v727 = vor.u32 4788187, %v726
        %v728 = vand.u32 2147483647, %v727
        %v730 = vcvt.s32.f32 %v723
        %v731 = vmul.f32 %v730, %v728
        %v732 = vxor.u32 %v731, 2147483648
        %v733 = vsel %vm650, %v732, %v731
        %v734 = vsub.s32 4, %v710
        %v735 = vsel %vm650, %v734, %v710
        %v736 = vsel %vm649, %v335, %v733
        %v737 = vsel %vm649, 0, %v735
        %v738 = vcosq.f32.pop %v736
        %v739 = vsinq.f32.pop %v736
        %vm740 = vweird.f32 %v335
        %v741 = vadd.s32 %v737, 3
        %v742 = vand.u32 %v741, 3
        %vm743 = vcmp.lt.s32.totalorder %v742, 2
        %vm744 = vcmp.eq.s32.totalorder %v742, 0
        %v745 = vxor.u32 %v739, 2147483648
        %v746 = vsel %vm744, %v738, %v745
        %vm747 = vcmp.eq.s32.totalorder %v742, 2
        %v748 = vxor.u32 %v738, 2147483648
        %v749 = vsel %vm747, %v748, %v739
        %v750 = vsel %vm743, %v746, %v749
        %v751 = vsel %vm740, nan, %v750
        %752 = vst [vmem:[%s203 + $0xa0] sm:$0xff] %v439
        %753 = vst [vmem:[%s203 + $0xa8] sm:$0xff] %v543
        %754 = vst [vmem:[%s203 + $0xb0] sm:$0xff] %v647
        %755 = vst [vmem:[%s203 + $0xb8] sm:$0xff] %v751
        %v756 = vand.u32 2147483647, %v332
        %vm757 = vcmp.le.f32.partialorder %v756, 0.7853982
        %vm758 = vcmp.lt.s32.totalorder %v332, 0
        %v759 = vand.u32 %v332, 2139095040
        %v760 = vshrl.u32 %v759, 23
        %v761 = vsub.s32 %v760, 127
        %v762 = vand.u32 2147483647, %v332
        %v763 = vand.u32 %v762, 8388607
        %v764 = vor.u32 %v763, 8388608
        %v765 = vsub.s32 0, %v764
        %v766 = vadd.s32 %v761, 1
        %vm767 = vcmp.gt.s32.totalorder %v766, 0
        %v768 = vsel %vm767, %v766, 0
        %v769 = vshrl.u32 %v768, 5
        %v770 = vand.u32 %v768, 31
        %v771 = vsub.s32 32, %v770
        %v772 = vshrl.u32 683565275, %v771
        %v773 = vshll.u32 683565275, %v770
        %v774 = vshrl.u32 2475754826, %v771
        %v775 = vor.u32 %v773, %v774
        %v776 = vshll.u32 2475754826, %v770
        %v777 = vshrl.u32 2131351028, %v771
        %v778 = vor.u32 %v776, %v777
        %v779 = vshll.u32 2131351028, %v770
        %v780 = vshrl.u32 2102212464, %v771
        %v781 = vor.u32 %v779, %v780
        %v782 = vshll.u32 2102212464, %v770
        %v783 = vshrl.u32 920167782, %v771
        %v784 = vor.u32 %v782, %v783
        %v785 = vshll.u32 920167782, %v770
        %v786 = vshrl.u32 1326507024, %v771
        %v787 = vor.u32 %v785, %v786
        %vm788 = vcmp.lt.s32.totalorder %v769, 1
        %vm789 = vcmp.lt.s32.totalorder %v769, 2
        %vm790 = vcmp.lt.s32.totalorder %v769, 3
        %vm791 = vcmp.lt.s32.totalorder %v769, 4
        %v792 = vsel %vm788, %v772, %v775
        %v793 = vsel %vm791, %v781, 2102212464
        %v794 = vsel %vm790, %v778, %v793
        %v795 = vsel %vm789, %v792, %v794
        %v796 = vsel %vm788, %v775, %v778
        %v797 = vsel %vm791, %v784, 920167782
        %v798 = vsel %vm790, %v781, %v797
        %v799 = vsel %vm789, %v796, %v798
        %v800 = vsel %vm788, %v778, %v781
        %v801 = vsel %vm791, %v787, 1326507024
        %v802 = vsel %vm790, %v784, %v801
        %v803 = vsel %vm789, %v800, %v802
        %v804 = vshll.u32 %v764, 8
        %v805 = vmul.u32.u64.compose %v804, %v803
        %v806 = vextract.low.u32 %v805
        %v807 = vextract.high.u32 %v805
        %v808 = vmul.u32.u64.compose %v804, %v799
        %v809 = vextract.low.u32 %v808
        %v810 = vextract.high.u32 %v808
        %v811 = vmul.u32 %v804, %v795
        %v812 = vadd.s32 %v807, %v809
        %vm813 = vc.u32 %v807, %v809
        %v814 = vadd.s32 %v810, 1
        %v815 = vsel %vm813, %v814, %v810
        %v816 = vadd.s32 %v811, %v815
        %v817 = vadd.s32 %v816, 536870912
        %v818 = vshrl.u32 %v817, 30
        %v819 = vshll.u32 %v818, 30
        %v820 = vsub.s32 %v816, %v819
        %vm821 = vcmp.lt.s32.totalorder %v820, 0
        %v822 = vsub.s32 0, %v820
        %v823 = vsel %vm821, %v822, %v820
        %v824 = vclz %v823
        %v825 = vsub.s32 %v824, 2
        %vm826 = vcmp.gt.s32.totalorder 0, %v825
        %v827 = vsel %vm826, 0, %v825
        %v828 = vsub.s32 32, %v827
        %v829 = vshll.u32 %v820, %v827
        %v830 = vshrl.u32 %v812, %v828
        %v831 = vor.u32 %v829, %v830
        %v832 = vsub.s32 4294967266, %v827
        %v833 = vadd.s32 %v832, 127
        %v834 = vshll.u32 %v833, 23
        %v835 = vor.u32 4788187, %v834
        %v836 = vand.u32 2147483647, %v835
        %v838 = vcvt.s32.f32 %v831
        %v839 = vmul.f32 %v838, %v836
        %v840 = vxor.u32 %v839, 2147483648
        %v841 = vsel %vm758, %v840, %v839
        %v842 = vsub.s32 4, %v818
        %v843 = vsel %vm758, %v842, %v818
        %v844 = vsel %vm757, %v332, %v841
        %v845 = vsel %vm757, 0, %v843
        %v846 = vcosq.f32.pop %v844
        %v847 = vsinq.f32.pop %v844
        %vm848 = vweird.f32 %v332
        %v849 = vand.u32 %v845, 3
        %vm850 = vcmp.lt.s32.totalorder %v849, 2
        %vm851 = vcmp.eq.s32.totalorder %v849, 0
        %v852 = vxor.u32 %v847, 2147483648
        %v853 = vsel %vm851, %v846, %v852
        %vm854 = vcmp.eq.s32.totalorder %v849, 2
        %v855 = vxor.u32 %v846, 2147483648
        %v856 = vsel %vm854, %v855, %v847
        %v857 = vsel %vm850, %v853, %v856
        %v858 = vsel %vm848, nan, %v857
        %v859 = vand.u32 2147483647, %v333
        %vm860 = vcmp.le.f32.partialorder %v859, 0.7853982
        %vm861 = vcmp.lt.s32.totalorder %v333, 0
        %v862 = vand.u32 %v333, 2139095040
        %v863 = vshrl.u32 %v862, 23
        %v864 = vsub.s32 %v863, 127
        %v865 = vand.u32 2147483647, %v333
        %v866 = vand.u32 %v865, 8388607
        %v867 = vor.u32 %v866, 8388608
        %v868 = vsub.s32 0, %v867
        %v869 = vadd.s32 %v864, 1
        %vm870 = vcmp.gt.s32.totalorder %v869, 0
        %v871 = vsel %vm870, %v869, 0
        %v872 = vshrl.u32 %v871, 5
        %v873 = vand.u32 %v871, 31
        %v874 = vsub.s32 32, %v873
        %v875 = vshrl.u32 683565275, %v874
        %v876 = vshll.u32 683565275, %v873
        %v877 = vshrl.u32 2475754826, %v874
        %v878 = vor.u32 %v876, %v877
        %v879 = vshll.u32 2475754826, %v873
        %v880 = vshrl.u32 2131351028, %v874
        %v881 = vor.u32 %v879, %v880
        %v882 = vshll.u32 2131351028, %v873
        %v883 = vshrl.u32 2102212464, %v874
        %v884 = vor.u32 %v882, %v883
        %v885 = vshll.u32 2102212464, %v873
        %v886 = vshrl.u32 920167782, %v874
        %v887 = vor.u32 %v885, %v886
        %v888 = vshll.u32 920167782, %v873
        %v889 = vshrl.u32 1326507024, %v874
        %v890 = vor.u32 %v888, %v889
        %vm891 = vcmp.lt.s32.totalorder %v872, 1
        %vm892 = vcmp.lt.s32.totalorder %v872, 2
        %vm893 = vcmp.lt.s32.totalorder %v872, 3
        %vm894 = vcmp.lt.s32.totalorder %v872, 4
        %v895 = vsel %vm891, %v875, %v878
        %v896 = vsel %vm894, %v884, 2102212464
        %v897 = vsel %vm893, %v881, %v896
        %v898 = vsel %vm892, %v895, %v897
        %v899 = vsel %vm891, %v878, %v881
        %v900 = vsel %vm894, %v887, 920167782
        %v901 = vsel %vm893, %v884, %v900
        %v902 = vsel %vm892, %v899, %v901
        %v903 = vsel %vm891, %v881, %v884
        %v904 = vsel %vm894, %v890, 1326507024
        %v905 = vsel %vm893, %v887, %v904
        %v906 = vsel %vm892, %v903, %v905
        %v907 = vshll.u32 %v867, 8
        %v908 = vmul.u32.u64.compose %v907, %v906
        %v909 = vextract.low.u32 %v908
        %v910 = vextract.high.u32 %v908
        %v911 = vmul.u32.u64.compose %v907, %v902
        %v912 = vextract.low.u32 %v911
        %v913 = vextract.high.u32 %v911
        %v914 = vmul.u32 %v907, %v898
        %v915 = vadd.s32 %v910, %v912
        %vm916 = vc.u32 %v910, %v912
        %v917 = vadd.s32 %v913, 1
        %v918 = vsel %vm916, %v917, %v913
        %v919 = vadd.s32 %v914, %v918
        %v920 = vadd.s32 %v919, 536870912
        %v921 = vshrl.u32 %v920, 30
        %v922 = vshll.u32 %v921, 30
        %v923 = vsub.s32 %v919, %v922
        %vm924 = vcmp.lt.s32.totalorder %v923, 0
        %v925 = vsub.s32 0, %v923
        %v926 = vsel %vm924, %v925, %v923
        %v927 = vclz %v926
        %v928 = vsub.s32 %v927, 2
        %vm929 = vcmp.gt.s32.totalorder 0, %v928
        %v930 = vsel %vm929, 0, %v928
        %v931 = vsub.s32 32, %v930
        %v932 = vshll.u32 %v923, %v930
        %v933 = vshrl.u32 %v915, %v931
        %v934 = vor.u32 %v932, %v933
        %v935 = vsub.s32 4294967266, %v930
        %v936 = vadd.s32 %v935, 127
        %v937 = vshll.u32 %v936, 23
        %v938 = vor.u32 4788187, %v937
        %v939 = vand.u32 2147483647, %v938
        %v941 = vcvt.s32.f32 %v934
        %v942 = vmul.f32 %v941, %v939
        %v943 = vxor.u32 %v942, 2147483648
        %v944 = vsel %vm861, %v943, %v942
        %v945 = vsub.s32 4, %v921
        %v946 = vsel %vm861, %v945, %v921
        %v947 = vsel %vm860, %v333, %v944
        %v948 = vsel %vm860, 0, %v946
        %v949 = vcosq.f32.pop %v947
        %v950 = vsinq.f32.pop %v947
        %vm951 = vweird.f32 %v333
        %v952 = vand.u32 %v948, 3
        %vm953 = vcmp.lt.s32.totalorder %v952, 2
        %vm954 = vcmp.eq.s32.totalorder %v952, 0
        %v955 = vxor.u32 %v950, 2147483648
        %v956 = vsel %vm954, %v949, %v955
        %vm957 = vcmp.eq.s32.totalorder %v952, 2
        %v958 = vxor.u32 %v949, 2147483648
        %v959 = vsel %vm957, %v958, %v950
        %v960 = vsel %vm953, %v956, %v959
        %v961 = vsel %vm951, nan, %v960
        %v962 = vand.u32 2147483647, %v334
        %vm963 = vcmp.le.f32.partialorder %v962, 0.7853982
        %vm964 = vcmp.lt.s32.totalorder %v334, 0
        %v965 = vand.u32 %v334, 2139095040
        %v966 = vshrl.u32 %v965, 23
        %v967 = vsub.s32 %v966, 127
        %v968 = vand.u32 2147483647, %v334
        %v969 = vand.u32 %v968, 8388607
        %v970 = vor.u32 %v969, 8388608
        %v971 = vsub.s32 0, %v970
        %v972 = vadd.s32 %v967, 1
        %vm973 = vcmp.gt.s32.totalorder %v972, 0
        %v974 = vsel %vm973, %v972, 0
        %v975 = vshrl.u32 %v974, 5
        %v976 = vand.u32 %v974, 31
        %v977 = vsub.s32 32, %v976
        %v978 = vshrl.u32 683565275, %v977
        %v979 = vshll.u32 683565275, %v976
        %v980 = vshrl.u32 2475754826, %v977
        %v981 = vor.u32 %v979, %v980
        %v982 = vshll.u32 2475754826, %v976
        %v983 = vshrl.u32 2131351028, %v977
        %v984 = vor.u32 %v982, %v983
        %v985 = vshll.u32 2131351028, %v976
        %v986 = vshrl.u32 2102212464, %v977
        %v987 = vor.u32 %v985, %v986
        %v988 = vshll.u32 2102212464, %v976
        %v989 = vshrl.u32 920167782, %v977
        %v990 = vor.u32 %v988, %v989
        %v991 = vshll.u32 920167782, %v976
        %v992 = vshrl.u32 1326507024, %v977
        %v993 = vor.u32 %v991, %v992
        %vm994 = vcmp.lt.s32.totalorder %v975, 1
        %vm995 = vcmp.lt.s32.totalorder %v975, 2
        %vm996 = vcmp.lt.s32.totalorder %v975, 3
        %vm997 = vcmp.lt.s32.totalorder %v975, 4
        %v998 = vsel %vm994, %v978, %v981
        %v999 = vsel %vm997, %v987, 2102212464
        %v1000 = vsel %vm996, %v984, %v999
        %v1001 = vsel %vm995, %v998, %v1000
        %v1002 = vsel %vm994, %v981, %v984
        %v1003 = vsel %vm997, %v990, 920167782
        %v1004 = vsel %vm996, %v987, %v1003
        %v1005 = vsel %vm995, %v1002, %v1004
        %v1006 = vsel %vm994, %v984, %v987
        %v1007 = vsel %vm997, %v993, 1326507024
        %v1008 = vsel %vm996, %v990, %v1007
        %v1009 = vsel %vm995, %v1006, %v1008
        %v1010 = vshll.u32 %v970, 8
        %v1011 = vmul.u32.u64.compose %v1010, %v1009
        %v1012 = vextract.low.u32 %v1011
        %v1013 = vextract.high.u32 %v1011
        %v1014 = vmul.u32.u64.compose %v1010, %v1005
        %v1015 = vextract.low.u32 %v1014
        %v1016 = vextract.high.u32 %v1014
        %v1017 = vmul.u32 %v1010, %v1001
        %v1018 = vadd.s32 %v1013, %v1015
        %vm1019 = vc.u32 %v1013, %v1015
        %v1020 = vadd.s32 %v1016, 1
        %v1021 = vsel %vm1019, %v1020, %v1016
        %v1022 = vadd.s32 %v1017, %v1021
        %v1023 = vadd.s32 %v1022, 536870912
        %v1024 = vshrl.u32 %v1023, 30
        %v1025 = vshll.u32 %v1024, 30
        %v1026 = vsub.s32 %v1022, %v1025
        %vm1027 = vcmp.lt.s32.totalorder %v1026, 0
        %v1028 = vsub.s32 0, %v1026
        %v1029 = vsel %vm1027, %v1028, %v1026
        %v1030 = vclz %v1029
        %v1031 = vsub.s32 %v1030, 2
        %vm1032 = vcmp.gt.s32.totalorder 0, %v1031
        %v1033 = vsel %vm1032, 0, %v1031
        %v1034 = vsub.s32 32, %v1033
        %v1035 = vshll.u32 %v1026, %v1033
        %v1036 = vshrl.u32 %v1018, %v1034
        %v1037 = vor.u32 %v1035, %v1036
        %v1038 = vsub.s32 4294967266, %v1033
        %v1039 = vadd.s32 %v1038, 127
        %v1040 = vshll.u32 %v1039, 23
        %v1041 = vor.u32 4788187, %v1040
        %v1042 = vand.u32 2147483647, %v1041
        %v1044 = vcvt.s32.f32 %v1037
        %v1045 = vmul.f32 %v1044, %v1042
        %v1046 = vxor.u32 %v1045, 2147483648
        %v1047 = vsel %vm964, %v1046, %v1045
        %v1048 = vsub.s32 4, %v1024
        %v1049 = vsel %vm964, %v1048, %v1024
        %v1050 = vsel %vm963, %v334, %v1047
        %v1051 = vsel %vm963, 0, %v1049
        %v1052 = vcosq.f32.pop %v1050
        %v1053 = vsinq.f32.pop %v1050
        %vm1054 = vweird.f32 %v334
        %v1055 = vand.u32 %v1051, 3
        %vm1056 = vcmp.lt.s32.totalorder %v1055, 2
        %vm1057 = vcmp.eq.s32.totalorder %v1055, 0
        %v1058 = vxor.u32 %v1053, 2147483648
        %v1059 = vsel %vm1057, %v1052, %v1058
        %vm1060 = vcmp.eq.s32.totalorder %v1055, 2
        %v1061 = vxor.u32 %v1052, 2147483648
        %v1062 = vsel %vm1060, %v1061, %v1053
        %v1063 = vsel %vm1056, %v1059, %v1062
        %v1064 = vsel %vm1054, nan, %v1063
        %v1065 = vand.u32 2147483647, %v335
        %vm1066 = vcmp.le.f32.partialorder %v1065, 0.7853982
        %vm1067 = vcmp.lt.s32.totalorder %v335, 0
        %v1068 = vand.u32 %v335, 2139095040
        %v1069 = vshrl.u32 %v1068, 23
        %v1070 = vsub.s32 %v1069, 127
        %v1071 = vand.u32 2147483647, %v335
        %v1072 = vand.u32 %v1071, 8388607
        %v1073 = vor.u32 %v1072, 8388608
        %v1074 = vsub.s32 0, %v1073
        %v1075 = vadd.s32 %v1070, 1
        %vm1076 = vcmp.gt.s32.totalorder %v1075, 0
        %v1077 = vsel %vm1076, %v1075, 0
        %v1078 = vshrl.u32 %v1077, 5
        %v1079 = vand.u32 %v1077, 31
        %v1080 = vsub.s32 32, %v1079
        %v1081 = vshrl.u32 683565275, %v1080
        %v1082 = vshll.u32 683565275, %v1079
        %v1083 = vshrl.u32 2475754826, %v1080
        %v1084 = vor.u32 %v1082, %v1083
        %v1085 = vshll.u32 2475754826, %v1079
        %v1086 = vshrl.u32 2131351028, %v1080
        %v1087 = vor.u32 %v1085, %v1086
        %v1088 = vshll.u32 2131351028, %v1079
        %v1089 = vshrl.u32 2102212464, %v1080
        %v1090 = vor.u32 %v1088, %v1089
        %v1091 = vshll.u32 2102212464, %v1079
        %v1092 = vshrl.u32 920167782, %v1080
        %v1093 = vor.u32 %v1091, %v1092
        %v1094 = vshll.u32 920167782, %v1079
        %v1095 = vshrl.u32 1326507024, %v1080
        %v1096 = vor.u32 %v1094, %v1095
        %vm1097 = vcmp.lt.s32.totalorder %v1078, 1
        %vm1098 = vcmp.lt.s32.totalorder %v1078, 2
        %vm1099 = vcmp.lt.s32.totalorder %v1078, 3
        %vm1100 = vcmp.lt.s32.totalorder %v1078, 4
        %v1101 = vsel %vm1097, %v1081, %v1084
        %v1102 = vsel %vm1100, %v1090, 2102212464
        %v1103 = vsel %vm1099, %v1087, %v1102
        %v1104 = vsel %vm1098, %v1101, %v1103
        %v1105 = vsel %vm1097, %v1084, %v1087
        %v1106 = vsel %vm1100, %v1093, 920167782
        %v1107 = vsel %vm1099, %v1090, %v1106
        %v1108 = vsel %vm1098, %v1105, %v1107
        %v1109 = vsel %vm1097, %v1087, %v1090
        %v1110 = vsel %vm1100, %v1096, 1326507024
        %v1111 = vsel %vm1099, %v1093, %v1110
        %v1112 = vsel %vm1098, %v1109, %v1111
        %v1113 = vshll.u32 %v1073, 8
        %v1114 = vmul.u32.u64.compose %v1113, %v1112
        %v1115 = vextract.low.u32 %v1114
        %v1116 = vextract.high.u32 %v1114
        %v1117 = vmul.u32.u64.compose %v1113, %v1108
        %v1118 = vextract.low.u32 %v1117
        %v1119 = vextract.high.u32 %v1117
        %v1120 = vmul.u32 %v1113, %v1104
        %v1121 = vadd.s32 %v1116, %v1118
        %vm1122 = vc.u32 %v1116, %v1118
        %v1123 = vadd.s32 %v1119, 1
        %v1124 = vsel %vm1122, %v1123, %v1119
        %v1125 = vadd.s32 %v1120, %v1124
        %v1126 = vadd.s32 %v1125, 536870912
        %v1127 = vshrl.u32 %v1126, 30
        %v1128 = vshll.u32 %v1127, 30
        %v1129 = vsub.s32 %v1125, %v1128
        %vm1130 = vcmp.lt.s32.totalorder %v1129, 0
        %v1131 = vsub.s32 0, %v1129
        %v1132 = vsel %vm1130, %v1131, %v1129
        %v1133 = vclz %v1132
        %v1134 = vsub.s32 %v1133, 2
        %vm1135 = vcmp.gt.s32.totalorder 0, %v1134
        %v1136 = vsel %vm1135, 0, %v1134
        %v1137 = vsub.s32 32, %v1136
        %v1138 = vshll.u32 %v1129, %v1136
        %v1139 = vshrl.u32 %v1121, %v1137
        %v1140 = vor.u32 %v1138, %v1139
        %v1141 = vsub.s32 4294967266, %v1136
        %v1142 = vadd.s32 %v1141, 127
        %v1143 = vshll.u32 %v1142, 23
        %v1144 = vor.u32 4788187, %v1143
        %v1145 = vand.u32 2147483647, %v1144
        %v1147 = vcvt.s32.f32 %v1140
        %v1148 = vmul.f32 %v1147, %v1145
        %v1149 = vxor.u32 %v1148, 2147483648
        %v1150 = vsel %vm1067, %v1149, %v1148
        %v1151 = vsub.s32 4, %v1127
        %v1152 = vsel %vm1067, %v1151, %v1127
        %v1153 = vsel %vm1066, %v335, %v1150
        %v1154 = vsel %vm1066, 0, %v1152
        %v1155 = vcosq.f32.pop %v1153
        %v1156 = vsinq.f32.pop %v1153
        %vm1157 = vweird.f32 %v335
        %v1158 = vand.u32 %v1154, 3
        %vm1159 = vcmp.lt.s32.totalorder %v1158, 2
        %vm1160 = vcmp.eq.s32.totalorder %v1158, 0
        %v1161 = vxor.u32 %v1156, 2147483648
        %v1162 = vsel %vm1160, %v1155, %v1161
        %vm1163 = vcmp.eq.s32.totalorder %v1158, 2
        %v1164 = vxor.u32 %v1155, 2147483648
        %v1165 = vsel %vm1163, %v1164, %v1156
        %v1166 = vsel %vm1159, %v1162, %v1165
        %v1167 = vsel %vm1157, nan, %v1166
        %1168 = vst [vmem:[%s203 + $0xe0] sm:$0xff] %v858
        %1169 = vst [vmem:[%s203 + $0xe8] sm:$0xff] %v961
        %1170 = vst [vmem:[%s203 + $0xf0] sm:$0xff] %v1064
        %1171 = vst [vmem:[%s203 + $0xf8] sm:$0xff] %v1167
        %v1172 = vlaneseq
        %v1173 = vshrl.u32 %v1172, 7
        %v1174 = vsub.s32 1, %v1173
        %v1175 = vrot.slane %v300, %v1174
        %v1176 = vlaneseq
        %v1177 = vshrl.u32 %v1176, 7
        %v1178 = vsub.s32 3, %v1177
        %v1179 = vrot.slane %v300, %v1178
        %v1182 = vlaneseq
        %v1183 = vshrl.u32 %v1182, 7
        %v1184 = vsub.s32 1, %v1183
        %v1185 = vrot.slane %v1175, %v1184
        %v1186 = vlaneseq
        %v1187 = vshrl.u32 %v1186, 7
        %v1188 = vsub.s32 1, %v1187
        %v1189 = vrot.slane %v1179, %v1188
        %v1190 = vmul.f32 %v306, %v1185
        %v1191 = vmul.f32 %v306, %v1189
        %v1192 = vmul.f32 %v311, %v1185
        %v1193 = vmul.f32 %v311, %v1189
        %v1194 = vand.u32 2147483647, %v1190
        %vm1195 = vcmp.le.f32.partialorder %v1194, 0.7853982
        %vm1196 = vcmp.lt.s32.totalorder %v1190, 0
        %v1197 = vand.u32 %v1190, 2139095040
        %v1198 = vshrl.u32 %v1197, 23
        %v1199 = vsub.s32 %v1198, 127
        %v1200 = vand.u32 2147483647, %v1190
        %v1201 = vand.u32 %v1200, 8388607
        %v1202 = vor.u32 %v1201, 8388608
        %v1203 = vsub.s32 0, %v1202
        %v1204 = vadd.s32 %v1199, 1
        %vm1205 = vcmp.gt.s32.totalorder %v1204, 0
        %v1206 = vsel %vm1205, %v1204, 0
        %v1207 = vshrl.u32 %v1206, 5
        %v1208 = vand.u32 %v1206, 31
        %v1209 = vsub.s32 32, %v1208
        %v1210 = vshrl.u32 683565275, %v1209
        %v1211 = vshll.u32 683565275, %v1208
        %v1212 = vshrl.u32 2475754826, %v1209
        %v1213 = vor.u32 %v1211, %v1212
        %v1214 = vshll.u32 2475754826, %v1208
        %v1215 = vshrl.u32 2131351028, %v1209
        %v1216 = vor.u32 %v1214, %v1215
        %v1217 = vshll.u32 2131351028, %v1208
        %v1218 = vshrl.u32 2102212464, %v1209
        %v1219 = vor.u32 %v1217, %v1218
        %v1220 = vshll.u32 2102212464, %v1208
        %v1221 = vshrl.u32 920167782, %v1209
        %v1222 = vor.u32 %v1220, %v1221
        %v1223 = vshll.u32 920167782, %v1208
        %v1224 = vshrl.u32 1326507024, %v1209
        %v1225 = vor.u32 %v1223, %v1224
        %vm1226 = vcmp.lt.s32.totalorder %v1207, 1
        %vm1227 = vcmp.lt.s32.totalorder %v1207, 2
        %vm1228 = vcmp.lt.s32.totalorder %v1207, 3
        %vm1229 = vcmp.lt.s32.totalorder %v1207, 4
        %v1230 = vsel %vm1226, %v1210, %v1213
        %v1231 = vsel %vm1229, %v1219, 2102212464
        %v1232 = vsel %vm1228, %v1216, %v1231
        %v1233 = vsel %vm1227, %v1230, %v1232
        %v1234 = vsel %vm1226, %v1213, %v1216
        %v1235 = vsel %vm1229, %v1222, 920167782
        %v1236 = vsel %vm1228, %v1219, %v1235
        %v1237 = vsel %vm1227, %v1234, %v1236
        %v1238 = vsel %vm1226, %v1216, %v1219
        %v1239 = vsel %vm1229, %v1225, 1326507024
        %v1240 = vsel %vm1228, %v1222, %v1239
        %v1241 = vsel %vm1227, %v1238, %v1240
        %v1242 = vshll.u32 %v1202, 8
        %v1243 = vmul.u32.u64.compose %v1242, %v1241
        %v1244 = vextract.low.u32 %v1243
        %v1245 = vextract.high.u32 %v1243
        %v1246 = vmul.u32.u64.compose %v1242, %v1237
        %v1247 = vextract.low.u32 %v1246
        %v1248 = vextract.high.u32 %v1246
        %v1249 = vmul.u32 %v1242, %v1233
        %v1250 = vadd.s32 %v1245, %v1247
        %vm1251 = vc.u32 %v1245, %v1247
        %v1252 = vadd.s32 %v1248, 1
        %v1253 = vsel %vm1251, %v1252, %v1248
        %v1254 = vadd.s32 %v1249, %v1253
        %v1255 = vadd.s32 %v1254, 536870912
        %v1256 = vshrl.u32 %v1255, 30
        %v1257 = vshll.u32 %v1256, 30
        %v1258 = vsub.s32 %v1254, %v1257
        %vm1259 = vcmp.lt.s32.totalorder %v1258, 0
        %v1260 = vsub.s32 0, %v1258
        %v1261 = vsel %vm1259, %v1260, %v1258
        %v1262 = vclz %v1261
        %v1263 = vsub.s32 %v1262, 2
        %vm1264 = vcmp.gt.s32.totalorder 0, %v1263
        %v1265 = vsel %vm1264, 0, %v1263
        %v1266 = vsub.s32 32, %v1265
        %v1267 = vshll.u32 %v1258, %v1265
        %v1268 = vshrl.u32 %v1250, %v1266
        %v1269 = vor.u32 %v1267, %v1268
        %v1270 = vsub.s32 4294967266, %v1265
        %v1271 = vadd.s32 %v1270, 127
        %v1272 = vshll.u32 %v1271, 23
        %v1273 = vor.u32 4788187, %v1272
        %v1274 = vand.u32 2147483647, %v1273
        %v1276 = vcvt.s32.f32 %v1269
        %v1277 = vmul.f32 %v1276, %v1274
        %v1278 = vxor.u32 %v1277, 2147483648
        %v1279 = vsel %vm1196, %v1278, %v1277
        %v1280 = vsub.s32 4, %v1256
        %v1281 = vsel %vm1196, %v1280, %v1256
        %v1282 = vsel %vm1195, %v1190, %v1279
        %v1283 = vsel %vm1195, 0, %v1281
        %v1284 = vcosq.f32.pop %v1282
        %v1285 = vsinq.f32.pop %v1282
        %vm1286 = vweird.f32 %v1190
        %v1287 = vadd.s32 %v1283, 3
        %v1288 = vand.u32 %v1287, 3
        %vm1289 = vcmp.lt.s32.totalorder %v1288, 2
        %vm1290 = vcmp.eq.s32.totalorder %v1288, 0
        %v1291 = vxor.u32 %v1285, 2147483648
        %v1292 = vsel %vm1290, %v1284, %v1291
        %vm1293 = vcmp.eq.s32.totalorder %v1288, 2
        %v1294 = vxor.u32 %v1284, 2147483648
        %v1295 = vsel %vm1293, %v1294, %v1285
        %v1296 = vsel %vm1289, %v1292, %v1295
        %v1297 = vsel %vm1286, nan, %v1296
        %v1298 = vand.u32 2147483647, %v1191
        %vm1299 = vcmp.le.f32.partialorder %v1298, 0.7853982
        %vm1300 = vcmp.lt.s32.totalorder %v1191, 0
        %v1301 = vand.u32 %v1191, 2139095040
        %v1302 = vshrl.u32 %v1301, 23
        %v1303 = vsub.s32 %v1302, 127
        %v1304 = vand.u32 2147483647, %v1191
        %v1305 = vand.u32 %v1304, 8388607
        %v1306 = vor.u32 %v1305, 8388608
        %v1307 = vsub.s32 0, %v1306
        %v1308 = vadd.s32 %v1303, 1
        %vm1309 = vcmp.gt.s32.totalorder %v1308, 0
        %v1310 = vsel %vm1309, %v1308, 0
        %v1311 = vshrl.u32 %v1310, 5
        %v1312 = vand.u32 %v1310, 31
        %v1313 = vsub.s32 32, %v1312
        %v1314 = vshrl.u32 683565275, %v1313
        %v1315 = vshll.u32 683565275, %v1312
        %v1316 = vshrl.u32 2475754826, %v1313
        %v1317 = vor.u32 %v1315, %v1316
        %v1318 = vshll.u32 2475754826, %v1312
        %v1319 = vshrl.u32 2131351028, %v1313
        %v1320 = vor.u32 %v1318, %v1319
        %v1321 = vshll.u32 2131351028, %v1312
        %v1322 = vshrl.u32 2102212464, %v1313
        %v1323 = vor.u32 %v1321, %v1322
        %v1324 = vshll.u32 2102212464, %v1312
        %v1325 = vshrl.u32 920167782, %v1313
        %v1326 = vor.u32 %v1324, %v1325
        %v1327 = vshll.u32 920167782, %v1312
        %v1328 = vshrl.u32 1326507024, %v1313
        %v1329 = vor.u32 %v1327, %v1328
        %vm1330 = vcmp.lt.s32.totalorder %v1311, 1
        %vm1331 = vcmp.lt.s32.totalorder %v1311, 2
        %vm1332 = vcmp.lt.s32.totalorder %v1311, 3
        %vm1333 = vcmp.lt.s32.totalorder %v1311, 4
        %v1334 = vsel %vm1330, %v1314, %v1317
        %v1335 = vsel %vm1333, %v1323, 2102212464
        %v1336 = vsel %vm1332, %v1320, %v1335
        %v1337 = vsel %vm1331, %v1334, %v1336
        %v1338 = vsel %vm1330, %v1317, %v1320
        %v1339 = vsel %vm1333, %v1326, 920167782
        %v1340 = vsel %vm1332, %v1323, %v1339
        %v1341 = vsel %vm1331, %v1338, %v1340
        %v1342 = vsel %vm1330, %v1320, %v1323
        %v1343 = vsel %vm1333, %v1329, 1326507024
        %v1344 = vsel %vm1332, %v1326, %v1343
        %v1345 = vsel %vm1331, %v1342, %v1344
        %v1346 = vshll.u32 %v1306, 8
        %v1347 = vmul.u32.u64.compose %v1346, %v1345
        %v1348 = vextract.low.u32 %v1347
        %v1349 = vextract.high.u32 %v1347
        %v1350 = vmul.u32.u64.compose %v1346, %v1341
        %v1351 = vextract.low.u32 %v1350
        %v1352 = vextract.high.u32 %v1350
        %v1353 = vmul.u32 %v1346, %v1337
        %v1354 = vadd.s32 %v1349, %v1351
        %vm1355 = vc.u32 %v1349, %v1351
        %v1356 = vadd.s32 %v1352, 1
        %v1357 = vsel %vm1355, %v1356, %v1352
        %v1358 = vadd.s32 %v1353, %v1357
        %v1359 = vadd.s32 %v1358, 536870912
        %v1360 = vshrl.u32 %v1359, 30
        %v1361 = vshll.u32 %v1360, 30
        %v1362 = vsub.s32 %v1358, %v1361
        %vm1363 = vcmp.lt.s32.totalorder %v1362, 0
        %v1364 = vsub.s32 0, %v1362
        %v1365 = vsel %vm1363, %v1364, %v1362
        %v1366 = vclz %v1365
        %v1367 = vsub.s32 %v1366, 2
        %vm1368 = vcmp.gt.s32.totalorder 0, %v1367
        %v1369 = vsel %vm1368, 0, %v1367
        %v1370 = vsub.s32 32, %v1369
        %v1371 = vshll.u32 %v1362, %v1369
        %v1372 = vshrl.u32 %v1354, %v1370
        %v1373 = vor.u32 %v1371, %v1372
        %v1374 = vsub.s32 4294967266, %v1369
        %v1375 = vadd.s32 %v1374, 127
        %v1376 = vshll.u32 %v1375, 23
        %v1377 = vor.u32 4788187, %v1376
        %v1378 = vand.u32 2147483647, %v1377
        %v1380 = vcvt.s32.f32 %v1373
        %v1381 = vmul.f32 %v1380, %v1378
        %v1382 = vxor.u32 %v1381, 2147483648
        %v1383 = vsel %vm1300, %v1382, %v1381
        %v1384 = vsub.s32 4, %v1360
        %v1385 = vsel %vm1300, %v1384, %v1360
        %v1386 = vsel %vm1299, %v1191, %v1383
        %v1387 = vsel %vm1299, 0, %v1385
        %v1388 = vcosq.f32.pop %v1386
        %v1389 = vsinq.f32.pop %v1386
        %vm1390 = vweird.f32 %v1191
        %v1391 = vadd.s32 %v1387, 3
        %v1392 = vand.u32 %v1391, 3
        %vm1393 = vcmp.lt.s32.totalorder %v1392, 2
        %vm1394 = vcmp.eq.s32.totalorder %v1392, 0
        %v1395 = vxor.u32 %v1389, 2147483648
        %v1396 = vsel %vm1394, %v1388, %v1395
        %vm1397 = vcmp.eq.s32.totalorder %v1392, 2
        %v1398 = vxor.u32 %v1388, 2147483648
        %v1399 = vsel %vm1397, %v1398, %v1389
        %v1400 = vsel %vm1393, %v1396, %v1399
        %v1401 = vsel %vm1390, nan, %v1400
        %v1402 = vand.u32 2147483647, %v1192
        %vm1403 = vcmp.le.f32.partialorder %v1402, 0.7853982
        %vm1404 = vcmp.lt.s32.totalorder %v1192, 0
        %v1405 = vand.u32 %v1192, 2139095040
        %v1406 = vshrl.u32 %v1405, 23
        %v1407 = vsub.s32 %v1406, 127
        %v1408 = vand.u32 2147483647, %v1192
        %v1409 = vand.u32 %v1408, 8388607
        %v1410 = vor.u32 %v1409, 8388608
        %v1411 = vsub.s32 0, %v1410
        %v1412 = vadd.s32 %v1407, 1
        %vm1413 = vcmp.gt.s32.totalorder %v1412, 0
        %v1414 = vsel %vm1413, %v1412, 0
        %v1415 = vshrl.u32 %v1414, 5
        %v1416 = vand.u32 %v1414, 31
        %v1417 = vsub.s32 32, %v1416
        %v1418 = vshrl.u32 683565275, %v1417
        %v1419 = vshll.u32 683565275, %v1416
        %v1420 = vshrl.u32 2475754826, %v1417
        %v1421 = vor.u32 %v1419, %v1420
        %v1422 = vshll.u32 2475754826, %v1416
        %v1423 = vshrl.u32 2131351028, %v1417
        %v1424 = vor.u32 %v1422, %v1423
        %v1425 = vshll.u32 2131351028, %v1416
        %v1426 = vshrl.u32 2102212464, %v1417
        %v1427 = vor.u32 %v1425, %v1426
        %v1428 = vshll.u32 2102212464, %v1416
        %v1429 = vshrl.u32 920167782, %v1417
        %v1430 = vor.u32 %v1428, %v1429
        %v1431 = vshll.u32 920167782, %v1416
        %v1432 = vshrl.u32 1326507024, %v1417
        %v1433 = vor.u32 %v1431, %v1432
        %vm1434 = vcmp.lt.s32.totalorder %v1415, 1
        %vm1435 = vcmp.lt.s32.totalorder %v1415, 2
        %vm1436 = vcmp.lt.s32.totalorder %v1415, 3
        %vm1437 = vcmp.lt.s32.totalorder %v1415, 4
        %v1438 = vsel %vm1434, %v1418, %v1421
        %v1439 = vsel %vm1437, %v1427, 2102212464
        %v1440 = vsel %vm1436, %v1424, %v1439
        %v1441 = vsel %vm1435, %v1438, %v1440
        %v1442 = vsel %vm1434, %v1421, %v1424
        %v1443 = vsel %vm1437, %v1430, 920167782
        %v1444 = vsel %vm1436, %v1427, %v1443
        %v1445 = vsel %vm1435, %v1442, %v1444
        %v1446 = vsel %vm1434, %v1424, %v1427
        %v1447 = vsel %vm1437, %v1433, 1326507024
        %v1448 = vsel %vm1436, %v1430, %v1447
        %v1449 = vsel %vm1435, %v1446, %v1448
        %v1450 = vshll.u32 %v1410, 8
        %v1451 = vmul.u32.u64.compose %v1450, %v1449
        %v1452 = vextract.low.u32 %v1451
        %v1453 = vextract.high.u32 %v1451
        %v1454 = vmul.u32.u64.compose %v1450, %v1445
        %v1455 = vextract.low.u32 %v1454
        %v1456 = vextract.high.u32 %v1454
        %v1457 = vmul.u32 %v1450, %v1441
        %v1458 = vadd.s32 %v1453, %v1455
        %vm1459 = vc.u32 %v1453, %v1455
        %v1460 = vadd.s32 %v1456, 1
        %v1461 = vsel %vm1459, %v1460, %v1456
        %v1462 = vadd.s32 %v1457, %v1461
        %v1463 = vadd.s32 %v1462, 536870912
        %v1464 = vshrl.u32 %v1463, 30
        %v1465 = vshll.u32 %v1464, 30
        %v1466 = vsub.s32 %v1462, %v1465
        %vm1467 = vcmp.lt.s32.totalorder %v1466, 0
        %v1468 = vsub.s32 0, %v1466
        %v1469 = vsel %vm1467, %v1468, %v1466
        %v1470 = vclz %v1469
        %v1471 = vsub.s32 %v1470, 2
        %vm1472 = vcmp.gt.s32.totalorder 0, %v1471
        %v1473 = vsel %vm1472, 0, %v1471
        %v1474 = vsub.s32 32, %v1473
        %v1475 = vshll.u32 %v1466, %v1473
        %v1476 = vshrl.u32 %v1458, %v1474
        %v1477 = vor.u32 %v1475, %v1476
        %v1478 = vsub.s32 4294967266, %v1473
        %v1479 = vadd.s32 %v1478, 127
        %v1480 = vshll.u32 %v1479, 23
        %v1481 = vor.u32 4788187, %v1480
        %v1482 = vand.u32 2147483647, %v1481
        %v1484 = vcvt.s32.f32 %v1477
        %v1485 = vmul.f32 %v1484, %v1482
        %v1486 = vxor.u32 %v1485, 2147483648
        %v1487 = vsel %vm1404, %v1486, %v1485
        %v1488 = vsub.s32 4, %v1464
        %v1489 = vsel %vm1404, %v1488, %v1464
        %v1490 = vsel %vm1403, %v1192, %v1487
        %v1491 = vsel %vm1403, 0, %v1489
        %v1492 = vcosq.f32.pop %v1490
        %v1493 = vsinq.f32.pop %v1490
        %vm1494 = vweird.f32 %v1192
        %v1495 = vadd.s32 %v1491, 3
        %v1496 = vand.u32 %v1495, 3
        %vm1497 = vcmp.lt.s32.totalorder %v1496, 2
        %vm1498 = vcmp.eq.s32.totalorder %v1496, 0
        %v1499 = vxor.u32 %v1493, 2147483648
        %v1500 = vsel %vm1498, %v1492, %v1499
        %vm1501 = vcmp.eq.s32.totalorder %v1496, 2
        %v1502 = vxor.u32 %v1492, 2147483648
        %v1503 = vsel %vm1501, %v1502, %v1493
        %v1504 = vsel %vm1497, %v1500, %v1503
        %v1505 = vsel %vm1494, nan, %v1504
        %v1506 = vand.u32 2147483647, %v1193
        %vm1507 = vcmp.le.f32.partialorder %v1506, 0.7853982
        %vm1508 = vcmp.lt.s32.totalorder %v1193, 0
        %v1509 = vand.u32 %v1193, 2139095040
        %v1510 = vshrl.u32 %v1509, 23
        %v1511 = vsub.s32 %v1510, 127
        %v1512 = vand.u32 2147483647, %v1193
        %v1513 = vand.u32 %v1512, 8388607
        %v1514 = vor.u32 %v1513, 8388608
        %v1515 = vsub.s32 0, %v1514
        %v1516 = vadd.s32 %v1511, 1
        %vm1517 = vcmp.gt.s32.totalorder %v1516, 0
        %v1518 = vsel %vm1517, %v1516, 0
        %v1519 = vshrl.u32 %v1518, 5
        %v1520 = vand.u32 %v1518, 31
        %v1521 = vsub.s32 32, %v1520
        %v1522 = vshrl.u32 683565275, %v1521
        %v1523 = vshll.u32 683565275, %v1520
        %v1524 = vshrl.u32 2475754826, %v1521
        %v1525 = vor.u32 %v1523, %v1524
        %v1526 = vshll.u32 2475754826, %v1520
        %v1527 = vshrl.u32 2131351028, %v1521
        %v1528 = vor.u32 %v1526, %v1527
        %v1529 = vshll.u32 2131351028, %v1520
        %v1530 = vshrl.u32 2102212464, %v1521
        %v1531 = vor.u32 %v1529, %v1530
        %v1532 = vshll.u32 2102212464, %v1520
        %v1533 = vshrl.u32 920167782, %v1521
        %v1534 = vor.u32 %v1532, %v1533
        %v1535 = vshll.u32 920167782, %v1520
        %v1536 = vshrl.u32 1326507024, %v1521
        %v1537 = vor.u32 %v1535, %v1536
        %vm1538 = vcmp.lt.s32.totalorder %v1519, 1
        %vm1539 = vcmp.lt.s32.totalorder %v1519, 2
        %vm1540 = vcmp.lt.s32.totalorder %v1519, 3
        %vm1541 = vcmp.lt.s32.totalorder %v1519, 4
        %v1542 = vsel %vm1538, %v1522, %v1525
        %v1543 = vsel %vm1541, %v1531, 2102212464
        %v1544 = vsel %vm1540, %v1528, %v1543
        %v1545 = vsel %vm1539, %v1542, %v1544
        %v1546 = vsel %vm1538, %v1525, %v1528
        %v1547 = vsel %vm1541, %v1534, 920167782
        %v1548 = vsel %vm1540, %v1531, %v1547
        %v1549 = vsel %vm1539, %v1546, %v1548
        %v1550 = vsel %vm1538, %v1528, %v1531
        %v1551 = vsel %vm1541, %v1537, 1326507024
        %v1552 = vsel %vm1540, %v1534, %v1551
        %v1553 = vsel %vm1539, %v1550, %v1552
        %v1554 = vshll.u32 %v1514, 8
        %v1555 = vmul.u32.u64.compose %v1554, %v1553
        %v1556 = vextract.low.u32 %v1555
        %v1557 = vextract.high.u32 %v1555
        %v1558 = vmul.u32.u64.compose %v1554, %v1549
        %v1559 = vextract.low.u32 %v1558
        %v1560 = vextract.high.u32 %v1558
        %v1561 = vmul.u32 %v1554, %v1545
        %v1562 = vadd.s32 %v1557, %v1559
        %vm1563 = vc.u32 %v1557, %v1559
        %v1564 = vadd.s32 %v1560, 1
        %v1565 = vsel %vm1563, %v1564, %v1560
        %v1566 = vadd.s32 %v1561, %v1565
        %v1567 = vadd.s32 %v1566, 536870912
        %v1568 = vshrl.u32 %v1567, 30
        %v1569 = vshll.u32 %v1568, 30
        %v1570 = vsub.s32 %v1566, %v1569
        %vm1571 = vcmp.lt.s32.totalorder %v1570, 0
        %v1572 = vsub.s32 0, %v1570
        %v1573 = vsel %vm1571, %v1572, %v1570
        %v1574 = vclz %v1573
        %v1575 = vsub.s32 %v1574, 2
        %vm1576 = vcmp.gt.s32.totalorder 0, %v1575
        %v1577 = vsel %vm1576, 0, %v1575
        %v1578 = vsub.s32 32, %v1577
        %v1579 = vshll.u32 %v1570, %v1577
        %v1580 = vshrl.u32 %v1562, %v1578
        %v1581 = vor.u32 %v1579, %v1580
        %v1582 = vsub.s32 4294967266, %v1577
        %v1583 = vadd.s32 %v1582, 127
        %v1584 = vshll.u32 %v1583, 23
        %v1585 = vor.u32 4788187, %v1584
        %v1586 = vand.u32 2147483647, %v1585
        %v1588 = vcvt.s32.f32 %v1581
        %v1589 = vmul.f32 %v1588, %v1586
        %v1590 = vxor.u32 %v1589, 2147483648
        %v1591 = vsel %vm1508, %v1590, %v1589
        %v1592 = vsub.s32 4, %v1568
        %v1593 = vsel %vm1508, %v1592, %v1568
        %v1594 = vsel %vm1507, %v1193, %v1591
        %v1595 = vsel %vm1507, 0, %v1593
        %v1596 = vcosq.f32.pop %v1594
        %v1597 = vsinq.f32.pop %v1594
        %vm1598 = vweird.f32 %v1193
        %v1599 = vadd.s32 %v1595, 3
        %v1600 = vand.u32 %v1599, 3
        %vm1601 = vcmp.lt.s32.totalorder %v1600, 2
        %vm1602 = vcmp.eq.s32.totalorder %v1600, 0
        %v1603 = vxor.u32 %v1597, 2147483648
        %v1604 = vsel %vm1602, %v1596, %v1603
        %vm1605 = vcmp.eq.s32.totalorder %v1600, 2
        %v1606 = vxor.u32 %v1596, 2147483648
        %v1607 = vsel %vm1605, %v1606, %v1597
        %v1608 = vsel %vm1601, %v1604, %v1607
        %v1609 = vsel %vm1598, nan, %v1608
        %1610 = vst [vmem:[%s203 + $0xc0] sm:$0xff] %v1297
        %1611 = vst [vmem:[%s203 + $0xc8] sm:$0xff] %v1401
        %1612 = vst [vmem:[%s203 + $0xd0] sm:$0xff] %v1505
        %1613 = vst [vmem:[%s203 + $0xd8] sm:$0xff] %v1609
        %v1614 = vand.u32 2147483647, %v1190
        %vm1615 = vcmp.le.f32.partialorder %v1614, 0.7853982
        %vm1616 = vcmp.lt.s32.totalorder %v1190, 0
        %v1617 = vand.u32 %v1190, 2139095040
        %v1618 = vshrl.u32 %v1617, 23
        %v1619 = vsub.s32 %v1618, 127
        %v1620 = vand.u32 2147483647, %v1190
        %v1621 = vand.u32 %v1620, 8388607
        %v1622 = vor.u32 %v1621, 8388608
        %v1623 = vsub.s32 0, %v1622
        %v1624 = vadd.s32 %v1619, 1
        %vm1625 = vcmp.gt.s32.totalorder %v1624, 0
        %v1626 = vsel %vm1625, %v1624, 0
        %v1627 = vshrl.u32 %v1626, 5
        %v1628 = vand.u32 %v1626, 31
        %v1629 = vsub.s32 32, %v1628
        %v1630 = vshrl.u32 683565275, %v1629
        %v1631 = vshll.u32 683565275, %v1628
        %v1632 = vshrl.u32 2475754826, %v1629
        %v1633 = vor.u32 %v1631, %v1632
        %v1634 = vshll.u32 2475754826, %v1628
        %v1635 = vshrl.u32 2131351028, %v1629
        %v1636 = vor.u32 %v1634, %v1635
        %v1637 = vshll.u32 2131351028, %v1628
        %v1638 = vshrl.u32 2102212464, %v1629
        %v1639 = vor.u32 %v1637, %v1638
        %v1640 = vshll.u32 2102212464, %v1628
        %v1641 = vshrl.u32 920167782, %v1629
        %v1642 = vor.u32 %v1640, %v1641
        %v1643 = vshll.u32 920167782, %v1628
        %v1644 = vshrl.u32 1326507024, %v1629
        %v1645 = vor.u32 %v1643, %v1644
        %vm1646 = vcmp.lt.s32.totalorder %v1627, 1
        %vm1647 = vcmp.lt.s32.totalorder %v1627, 2
        %vm1648 = vcmp.lt.s32.totalorder %v1627, 3
        %vm1649 = vcmp.lt.s32.totalorder %v1627, 4
        %v1650 = vsel %vm1646, %v1630, %v1633
        %v1651 = vsel %vm1649, %v1639, 2102212464
        %v1652 = vsel %vm1648, %v1636, %v1651
        %v1653 = vsel %vm1647, %v1650, %v1652
        %v1654 = vsel %vm1646, %v1633, %v1636
        %v1655 = vsel %vm1649, %v1642, 920167782
        %v1656 = vsel %vm1648, %v1639, %v1655
        %v1657 = vsel %vm1647, %v1654, %v1656
        %v1658 = vsel %vm1646, %v1636, %v1639
        %v1659 = vsel %vm1649, %v1645, 1326507024
        %v1660 = vsel %vm1648, %v1642, %v1659
        %v1661 = vsel %vm1647, %v1658, %v1660
        %v1662 = vshll.u32 %v1622, 8
        %v1663 = vmul.u32.u64.compose %v1662, %v1661
        %v1664 = vextract.low.u32 %v1663
        %v1665 = vextract.high.u32 %v1663
        %v1666 = vmul.u32.u64.compose %v1662, %v1657
        %v1667 = vextract.low.u32 %v1666
        %v1668 = vextract.high.u32 %v1666
        %v1669 = vmul.u32 %v1662, %v1653
        %v1670 = vadd.s32 %v1665, %v1667
        %vm1671 = vc.u32 %v1665, %v1667
        %v1672 = vadd.s32 %v1668, 1
        %v1673 = vsel %vm1671, %v1672, %v1668
        %v1674 = vadd.s32 %v1669, %v1673
        %v1675 = vadd.s32 %v1674, 536870912
        %v1676 = vshrl.u32 %v1675, 30
        %v1677 = vshll.u32 %v1676, 30
        %v1678 = vsub.s32 %v1674, %v1677
        %vm1679 = vcmp.lt.s32.totalorder %v1678, 0
        %v1680 = vsub.s32 0, %v1678
        %v1681 = vsel %vm1679, %v1680, %v1678
        %v1682 = vclz %v1681
        %v1683 = vsub.s32 %v1682, 2
        %vm1684 = vcmp.gt.s32.totalorder 0, %v1683
        %v1685 = vsel %vm1684, 0, %v1683
        %v1686 = vsub.s32 32, %v1685
        %v1687 = vshll.u32 %v1678, %v1685
        %v1688 = vshrl.u32 %v1670, %v1686
        %v1689 = vor.u32 %v1687, %v1688
        %v1690 = vsub.s32 4294967266, %v1685
        %v1691 = vadd.s32 %v1690, 127
        %v1692 = vshll.u32 %v1691, 23
        %v1693 = vor.u32 4788187, %v1692
        %v1694 = vand.u32 2147483647, %v1693
        %v1696 = vcvt.s32.f32 %v1689
        %v1697 = vmul.f32 %v1696, %v1694
        %v1698 = vxor.u32 %v1697, 2147483648
        %v1699 = vsel %vm1616, %v1698, %v1697
        %v1700 = vsub.s32 4, %v1676
        %v1701 = vsel %vm1616, %v1700, %v1676
        %v1702 = vsel %vm1615, %v1190, %v1699
        %v1703 = vsel %vm1615, 0, %v1701
        %v1704 = vcosq.f32.pop %v1702
        %v1705 = vsinq.f32.pop %v1702
        %vm1706 = vweird.f32 %v1190
        %v1707 = vand.u32 %v1703, 3
        %vm1708 = vcmp.lt.s32.totalorder %v1707, 2
        %vm1709 = vcmp.eq.s32.totalorder %v1707, 0
        %v1710 = vxor.u32 %v1705, 2147483648
        %v1711 = vsel %vm1709, %v1704, %v1710
        %vm1712 = vcmp.eq.s32.totalorder %v1707, 2
        %v1713 = vxor.u32 %v1704, 2147483648
        %v1714 = vsel %vm1712, %v1713, %v1705
        %v1715 = vsel %vm1708, %v1711, %v1714
        %v1716 = vsel %vm1706, nan, %v1715
        %v1717 = vand.u32 2147483647, %v1191
        %vm1718 = vcmp.le.f32.partialorder %v1717, 0.7853982
        %vm1719 = vcmp.lt.s32.totalorder %v1191, 0
        %v1720 = vand.u32 %v1191, 2139095040
        %v1721 = vshrl.u32 %v1720, 23
        %v1722 = vsub.s32 %v1721, 127
        %v1723 = vand.u32 2147483647, %v1191
        %v1724 = vand.u32 %v1723, 8388607
        %v1725 = vor.u32 %v1724, 8388608
        %v1726 = vsub.s32 0, %v1725
        %v1727 = vadd.s32 %v1722, 1
        %vm1728 = vcmp.gt.s32.totalorder %v1727, 0
        %v1729 = vsel %vm1728, %v1727, 0
        %v1730 = vshrl.u32 %v1729, 5
        %v1731 = vand.u32 %v1729, 31
        %v1732 = vsub.s32 32, %v1731
        %v1733 = vshrl.u32 683565275, %v1732
        %v1734 = vshll.u32 683565275, %v1731
        %v1735 = vshrl.u32 2475754826, %v1732
        %v1736 = vor.u32 %v1734, %v1735
        %v1737 = vshll.u32 2475754826, %v1731
        %v1738 = vshrl.u32 2131351028, %v1732
        %v1739 = vor.u32 %v1737, %v1738
        %v1740 = vshll.u32 2131351028, %v1731
        %v1741 = vshrl.u32 2102212464, %v1732
        %v1742 = vor.u32 %v1740, %v1741
        %v1743 = vshll.u32 2102212464, %v1731
        %v1744 = vshrl.u32 920167782, %v1732
        %v1745 = vor.u32 %v1743, %v1744
        %v1746 = vshll.u32 920167782, %v1731
        %v1747 = vshrl.u32 1326507024, %v1732
        %v1748 = vor.u32 %v1746, %v1747
        %vm1749 = vcmp.lt.s32.totalorder %v1730, 1
        %vm1750 = vcmp.lt.s32.totalorder %v1730, 2
        %vm1751 = vcmp.lt.s32.totalorder %v1730, 3
        %vm1752 = vcmp.lt.s32.totalorder %v1730, 4
        %v1753 = vsel %vm1749, %v1733, %v1736
        %v1754 = vsel %vm1752, %v1742, 2102212464
        %v1755 = vsel %vm1751, %v1739, %v1754
        %v1756 = vsel %vm1750, %v1753, %v1755
        %v1757 = vsel %vm1749, %v1736, %v1739
        %v1758 = vsel %vm1752, %v1745, 920167782
        %v1759 = vsel %vm1751, %v1742, %v1758
        %v1760 = vsel %vm1750, %v1757, %v1759
        %v1761 = vsel %vm1749, %v1739, %v1742
        %v1762 = vsel %vm1752, %v1748, 1326507024
        %v1763 = vsel %vm1751, %v1745, %v1762
        %v1764 = vsel %vm1750, %v1761, %v1763
        %v1765 = vshll.u32 %v1725, 8
        %v1766 = vmul.u32.u64.compose %v1765, %v1764
        %v1767 = vextract.low.u32 %v1766
        %v1768 = vextract.high.u32 %v1766
        %v1769 = vmul.u32.u64.compose %v1765, %v1760
        %v1770 = vextract.low.u32 %v1769
        %v1771 = vextract.high.u32 %v1769
        %v1772 = vmul.u32 %v1765, %v1756
        %v1773 = vadd.s32 %v1768, %v1770
        %vm1774 = vc.u32 %v1768, %v1770
        %v1775 = vadd.s32 %v1771, 1
        %v1776 = vsel %vm1774, %v1775, %v1771
        %v1777 = vadd.s32 %v1772, %v1776
        %v1778 = vadd.s32 %v1777, 536870912
        %v1779 = vshrl.u32 %v1778, 30
        %v1780 = vshll.u32 %v1779, 30
        %v1781 = vsub.s32 %v1777, %v1780
        %vm1782 = vcmp.lt.s32.totalorder %v1781, 0
        %v1783 = vsub.s32 0, %v1781
        %v1784 = vsel %vm1782, %v1783, %v1781
        %v1785 = vclz %v1784
        %v1786 = vsub.s32 %v1785, 2
        %vm1787 = vcmp.gt.s32.totalorder 0, %v1786
        %v1788 = vsel %vm1787, 0, %v1786
        %v1789 = vsub.s32 32, %v1788
        %v1790 = vshll.u32 %v1781, %v1788
        %v1791 = vshrl.u32 %v1773, %v1789
        %v1792 = vor.u32 %v1790, %v1791
        %v1793 = vsub.s32 4294967266, %v1788
        %v1794 = vadd.s32 %v1793, 127
        %v1795 = vshll.u32 %v1794, 23
        %v1796 = vor.u32 4788187, %v1795
        %v1797 = vand.u32 2147483647, %v1796
        %v1799 = vcvt.s32.f32 %v1792
        %v1800 = vmul.f32 %v1799, %v1797
        %v1801 = vxor.u32 %v1800, 2147483648
        %v1802 = vsel %vm1719, %v1801, %v1800
        %v1803 = vsub.s32 4, %v1779
        %v1804 = vsel %vm1719, %v1803, %v1779
        %v1805 = vsel %vm1718, %v1191, %v1802
        %v1806 = vsel %vm1718, 0, %v1804
        %v1807 = vcosq.f32.pop %v1805
        %v1808 = vsinq.f32.pop %v1805
        %vm1809 = vweird.f32 %v1191
        %v1810 = vand.u32 %v1806, 3
        %vm1811 = vcmp.lt.s32.totalorder %v1810, 2
        %vm1812 = vcmp.eq.s32.totalorder %v1810, 0
        %v1813 = vxor.u32 %v1808, 2147483648
        %v1814 = vsel %vm1812, %v1807, %v1813
        %vm1815 = vcmp.eq.s32.totalorder %v1810, 2
        %v1816 = vxor.u32 %v1807, 2147483648
        %v1817 = vsel %vm1815, %v1816, %v1808
        %v1818 = vsel %vm1811, %v1814, %v1817
        %v1819 = vsel %vm1809, nan, %v1818
        %v1820 = vand.u32 2147483647, %v1192
        %vm1821 = vcmp.le.f32.partialorder %v1820, 0.7853982
        %vm1822 = vcmp.lt.s32.totalorder %v1192, 0
        %v1823 = vand.u32 %v1192, 2139095040
        %v1824 = vshrl.u32 %v1823, 23
        %v1825 = vsub.s32 %v1824, 127
        %v1826 = vand.u32 2147483647, %v1192
        %v1827 = vand.u32 %v1826, 8388607
        %v1828 = vor.u32 %v1827, 8388608
        %v1829 = vsub.s32 0, %v1828
        %v1830 = vadd.s32 %v1825, 1
        %vm1831 = vcmp.gt.s32.totalorder %v1830, 0
        %v1832 = vsel %vm1831, %v1830, 0
        %v1833 = vshrl.u32 %v1832, 5
        %v1834 = vand.u32 %v1832, 31
        %v1835 = vsub.s32 32, %v1834
        %v1836 = vshrl.u32 683565275, %v1835
        %v1837 = vshll.u32 683565275, %v1834
        %v1838 = vshrl.u32 2475754826, %v1835
        %v1839 = vor.u32 %v1837, %v1838
        %v1840 = vshll.u32 2475754826, %v1834
        %v1841 = vshrl.u32 2131351028, %v1835
        %v1842 = vor.u32 %v1840, %v1841
        %v1843 = vshll.u32 2131351028, %v1834
        %v1844 = vshrl.u32 2102212464, %v1835
        %v1845 = vor.u32 %v1843, %v1844
        %v1846 = vshll.u32 2102212464, %v1834
        %v1847 = vshrl.u32 920167782, %v1835
        %v1848 = vor.u32 %v1846, %v1847
        %v1849 = vshll.u32 920167782, %v1834
        %v1850 = vshrl.u32 1326507024, %v1835
        %v1851 = vor.u32 %v1849, %v1850
        %vm1852 = vcmp.lt.s32.totalorder %v1833, 1
        %vm1853 = vcmp.lt.s32.totalorder %v1833, 2
        %vm1854 = vcmp.lt.s32.totalorder %v1833, 3
        %vm1855 = vcmp.lt.s32.totalorder %v1833, 4
        %v1856 = vsel %vm1852, %v1836, %v1839
        %v1857 = vsel %vm1855, %v1845, 2102212464
        %v1858 = vsel %vm1854, %v1842, %v1857
        %v1859 = vsel %vm1853, %v1856, %v1858
        %v1860 = vsel %vm1852, %v1839, %v1842
        %v1861 = vsel %vm1855, %v1848, 920167782
        %v1862 = vsel %vm1854, %v1845, %v1861
        %v1863 = vsel %vm1853, %v1860, %v1862
        %v1864 = vsel %vm1852, %v1842, %v1845
        %v1865 = vsel %vm1855, %v1851, 1326507024
        %v1866 = vsel %vm1854, %v1848, %v1865
        %v1867 = vsel %vm1853, %v1864, %v1866
        %v1868 = vshll.u32 %v1828, 8
        %v1869 = vmul.u32.u64.compose %v1868, %v1867
        %v1870 = vextract.low.u32 %v1869
        %v1871 = vextract.high.u32 %v1869
        %v1872 = vmul.u32.u64.compose %v1868, %v1863
        %v1873 = vextract.low.u32 %v1872
        %v1874 = vextract.high.u32 %v1872
        %v1875 = vmul.u32 %v1868, %v1859
        %v1876 = vadd.s32 %v1871, %v1873
        %vm1877 = vc.u32 %v1871, %v1873
        %v1878 = vadd.s32 %v1874, 1
        %v1879 = vsel %vm1877, %v1878, %v1874
        %v1880 = vadd.s32 %v1875, %v1879
        %v1881 = vadd.s32 %v1880, 536870912
        %v1882 = vshrl.u32 %v1881, 30
        %v1883 = vshll.u32 %v1882, 30
        %v1884 = vsub.s32 %v1880, %v1883
        %vm1885 = vcmp.lt.s32.totalorder %v1884, 0
        %v1886 = vsub.s32 0, %v1884
        %v1887 = vsel %vm1885, %v1886, %v1884
        %v1888 = vclz %v1887
        %v1889 = vsub.s32 %v1888, 2
        %vm1890 = vcmp.gt.s32.totalorder 0, %v1889
        %v1891 = vsel %vm1890, 0, %v1889
        %v1892 = vsub.s32 32, %v1891
        %v1893 = vshll.u32 %v1884, %v1891
        %v1894 = vshrl.u32 %v1876, %v1892
        %v1895 = vor.u32 %v1893, %v1894
        %v1896 = vsub.s32 4294967266, %v1891
        %v1897 = vadd.s32 %v1896, 127
        %v1898 = vshll.u32 %v1897, 23
        %v1899 = vor.u32 4788187, %v1898
        %v1900 = vand.u32 2147483647, %v1899
        %v1902 = vcvt.s32.f32 %v1895
        %v1903 = vmul.f32 %v1902, %v1900
        %v1904 = vxor.u32 %v1903, 2147483648
        %v1905 = vsel %vm1822, %v1904, %v1903
        %v1906 = vsub.s32 4, %v1882
        %v1907 = vsel %vm1822, %v1906, %v1882
        %v1908 = vsel %vm1821, %v1192, %v1905
        %v1909 = vsel %vm1821, 0, %v1907
        %v1910 = vcosq.f32.pop %v1908
        %v1911 = vsinq.f32.pop %v1908
        %vm1912 = vweird.f32 %v1192
        %v1913 = vand.u32 %v1909, 3
        %vm1914 = vcmp.lt.s32.totalorder %v1913, 2
        %vm1915 = vcmp.eq.s32.totalorder %v1913, 0
        %v1916 = vxor.u32 %v1911, 2147483648
        %v1917 = vsel %vm1915, %v1910, %v1916
        %vm1918 = vcmp.eq.s32.totalorder %v1913, 2
        %v1919 = vxor.u32 %v1910, 2147483648
        %v1920 = vsel %vm1918, %v1919, %v1911
        %v1921 = vsel %vm1914, %v1917, %v1920
        %v1922 = vsel %vm1912, nan, %v1921
        %v1923 = vand.u32 2147483647, %v1193
        %vm1924 = vcmp.le.f32.partialorder %v1923, 0.7853982
        %vm1925 = vcmp.lt.s32.totalorder %v1193, 0
        %v1926 = vand.u32 %v1193, 2139095040
        %v1927 = vshrl.u32 %v1926, 23
        %v1928 = vsub.s32 %v1927, 127
        %v1929 = vand.u32 2147483647, %v1193
        %v1930 = vand.u32 %v1929, 8388607
        %v1931 = vor.u32 %v1930, 8388608
        %v1932 = vsub.s32 0, %v1931
        %v1933 = vadd.s32 %v1928, 1
        %vm1934 = vcmp.gt.s32.totalorder %v1933, 0
        %v1935 = vsel %vm1934, %v1933, 0
        %v1936 = vshrl.u32 %v1935, 5
        %v1937 = vand.u32 %v1935, 31
        %v1938 = vsub.s32 32, %v1937
        %v1939 = vshrl.u32 683565275, %v1938
        %v1940 = vshll.u32 683565275, %v1937
        %v1941 = vshrl.u32 2475754826, %v1938
        %v1942 = vor.u32 %v1940, %v1941
        %v1943 = vshll.u32 2475754826, %v1937
        %v1944 = vshrl.u32 2131351028, %v1938
        %v1945 = vor.u32 %v1943, %v1944
        %v1946 = vshll.u32 2131351028, %v1937
        %v1947 = vshrl.u32 2102212464, %v1938
        %v1948 = vor.u32 %v1946, %v1947
        %v1949 = vshll.u32 2102212464, %v1937
        %v1950 = vshrl.u32 920167782, %v1938
        %v1951 = vor.u32 %v1949, %v1950
        %v1952 = vshll.u32 920167782, %v1937
        %v1953 = vshrl.u32 1326507024, %v1938
        %v1954 = vor.u32 %v1952, %v1953
        %vm1955 = vcmp.lt.s32.totalorder %v1936, 1
        %vm1956 = vcmp.lt.s32.totalorder %v1936, 2
        %vm1957 = vcmp.lt.s32.totalorder %v1936, 3
        %vm1958 = vcmp.lt.s32.totalorder %v1936, 4
        %v1959 = vsel %vm1955, %v1939, %v1942
        %v1960 = vsel %vm1958, %v1948, 2102212464
        %v1961 = vsel %vm1957, %v1945, %v1960
        %v1962 = vsel %vm1956, %v1959, %v1961
        %v1963 = vsel %vm1955, %v1942, %v1945
        %v1964 = vsel %vm1958, %v1951, 920167782
        %v1965 = vsel %vm1957, %v1948, %v1964
        %v1966 = vsel %vm1956, %v1963, %v1965
        %v1967 = vsel %vm1955, %v1945, %v1948
        %v1968 = vsel %vm1958, %v1954, 1326507024
        %v1969 = vsel %vm1957, %v1951, %v1968
        %v1970 = vsel %vm1956, %v1967, %v1969
        %v1971 = vshll.u32 %v1931, 8
        %v1972 = vmul.u32.u64.compose %v1971, %v1970
        %v1973 = vextract.low.u32 %v1972
        %v1974 = vextract.high.u32 %v1972
        %v1975 = vmul.u32.u64.compose %v1971, %v1966
        %v1976 = vextract.low.u32 %v1975
        %v1977 = vextract.high.u32 %v1975
        %v1978 = vmul.u32 %v1971, %v1962
        %v1979 = vadd.s32 %v1974, %v1976
        %vm1980 = vc.u32 %v1974, %v1976
        %v1981 = vadd.s32 %v1977, 1
        %v1982 = vsel %vm1980, %v1981, %v1977
        %v1983 = vadd.s32 %v1978, %v1982
        %v1984 = vadd.s32 %v1983, 536870912
        %v1985 = vshrl.u32 %v1984, 30
        %v1986 = vshll.u32 %v1985, 30
        %v1987 = vsub.s32 %v1983, %v1986
        %vm1988 = vcmp.lt.s32.totalorder %v1987, 0
        %v1989 = vsub.s32 0, %v1987
        %v1990 = vsel %vm1988, %v1989, %v1987
        %v1991 = vclz %v1990
        %v1992 = vsub.s32 %v1991, 2
        %vm1993 = vcmp.gt.s32.totalorder 0, %v1992
        %v1994 = vsel %vm1993, 0, %v1992
        %v1995 = vsub.s32 32, %v1994
        %v1996 = vshll.u32 %v1987, %v1994
        %v1997 = vshrl.u32 %v1979, %v1995
        %v1998 = vor.u32 %v1996, %v1997
        %v1999 = vsub.s32 4294967266, %v1994
        %v2000 = vadd.s32 %v1999, 127
        %v2001 = vshll.u32 %v2000, 23
        %v2002 = vor.u32 4788187, %v2001
        %v2003 = vand.u32 2147483647, %v2002
        %v2005 = vcvt.s32.f32 %v1998
        %v2006 = vmul.f32 %v2005, %v2003
        %v2007 = vxor.u32 %v2006, 2147483648
        %v2008 = vsel %vm1925, %v2007, %v2006
        %v2009 = vsub.s32 4, %v1985
        %v2010 = vsel %vm1925, %v2009, %v1985
        %v2011 = vsel %vm1924, %v1193, %v2008
        %v2012 = vsel %vm1924, 0, %v2010
        %v2013 = vcosq.f32.pop %v2011
        %v2014 = vsinq.f32.pop %v2011
        %vm2015 = vweird.f32 %v1193
        %v2016 = vand.u32 %v2012, 3
        %vm2017 = vcmp.lt.s32.totalorder %v2016, 2
        %vm2018 = vcmp.eq.s32.totalorder %v2016, 0
        %v2019 = vxor.u32 %v2014, 2147483648
        %v2020 = vsel %vm2018, %v2013, %v2019
        %vm2021 = vcmp.eq.s32.totalorder %v2016, 2
        %v2022 = vxor.u32 %v2013, 2147483648
        %v2023 = vsel %vm2021, %v2022, %v2014
        %v2024 = vsel %vm2017, %v2020, %v2023
        %v2025 = vsel %vm2015, nan, %v2024
        %2026 = vst [vmem:[%s203 + $0x100] sm:$0xff] %v1716
        %2027 = vst [vmem:[%s203 + $0x108] sm:$0xff] %v1819
        %2028 = vst [vmem:[%s203 + $0x110] sm:$0xff] %v1922
        %2029 = vst [vmem:[%s203 + $0x118] sm:$0xff] %v2025
        %s2030 = sand.u32 %s114, 1
        %s2031 = scalar_lea.sflag [#allocation3], %s2030
        %s2032 = sand.u32 %s114, 1
        %s2033 = smul.addr %s2032, 288
        %s2034 = scalar_lea.vmem [#allocation2], %s2033
        // Predicated region
        $region33: #{tpu_custom_call.1} parent=31 // pred_check
          %p2035 = pneg %p124
        $region34: #{tpu_custom_call.1} parent=31 // pred_check_branch
          %2037 = sbr.rel (%p2035) target = $region36
        $region35: #{tpu_custom_call.1} parent=31 // pred_region
          %s2038 = smul.u32 2, %s22
          %s2040 = ssub.s32 4608, 4608
          %2041 = vsyncadd %s2031, %s2040
          %s2042 = smul.addr %s21, 36
          %s2043 = sadd.s32 %s2038, %s2042
          %s2044 = smul.addr %s2043, 128
          %s2045 = scalar_lea.hbm %s3, %s2044
          %s2046 = sshll.u32 %s2034, 4
          %s2047 = int_to_ptr.vmem [resolvable:$true] %s2046
          %2052 = dma.vmem_to_hbm [thread:$0]  %s2047, 4608, %s2045, %s2031, 256, 256, 16
        $region36: #{tpu_custom_call.1} parent=31 // pred_fallthru
          _
      $region32: #{tpu_custom_call.1} parent=5 // pred_fallthru
        _
      %p2053 = scmp.le.s32.totalorder 2, %s12
      // Predicated region
      $region37: #{tpu_custom_call.1} parent=5 // pred_check
        %p2054 = pneg %p2053
      $region38: #{tpu_custom_call.1} parent=5 // pred_check_branch
        %2056 = sbr.rel (%p2054) target = $region40
      $region39: #{tpu_custom_call.1} parent=5 // pred_region
        %s2057 = ssub.s32 %s12, 2
        // Predicated region
        $region41: #{tpu_custom_call.1} parent=39 // pred_check
          %p2058 = pneg %p130
        $region42: #{tpu_custom_call.1} parent=39 // pred_check_branch
          %2060 = sbr.rel (%p2058) target = $region44
        $region43: #{tpu_custom_call.1} parent=39 // pred_region
          %s2061 = sand.u32 %s115, 1
          %s2062 = scalar_lea.sflag [#allocation3], %s2061
          %s2063 = sand.u32 %s115, 1
          %s2064 = smul.addr %s2063, 288
          %s2065 = scalar_lea.vmem [#allocation2], %s2064
          %2066 = dma.done %s2062, 4608
        $region44: #{tpu_custom_call.1} parent=39 // pred_fallthru
          _
      $region40: #{tpu_custom_call.1} parent=5 // pred_fallthru
        _
    $region6: #{tpu_custom_call.1} parent=1 // loop_footer
      %s16 = sadd.s32 1, %s12
    $region7: #{tpu_custom_call.1} parent=1 // loop_footer_branch
      %11 = sbr.rel target = $region3
    $region8: #{tpu_custom_call.1} parent=1 // loop_exit
      _
    %2067 = vsyncpa [#allocation3], 1
    %s2068 = scalar_lea.sflag [#allocation3], 1
    %2069 = vsyncpa %s2068, 1

</llo_original>
